<compile_context>
chip_gen: v7x
topology: tpu7x:2x2x1
jax: 0.10.0
libtpu: 0.0.40
codegen_flags: <defaults>
</compile_context>

<pallas_src>
import functools

import jax
import jax.numpy as jnp
from jax.experimental import pallas as pl
from jax.experimental.pallas import tpu as pltpu


# --------------------------------------------------------------------------
# Kernel
# --------------------------------------------------------------------------
def _onehot_dqn_kernel(x_ref,
                       w1_ref, b1_ref,
                       w2_ref, b2_ref,
                       w3_ref, b3_ref,
                       w4_ref, b4_ref,
                       o_ref):
    # Activations are cast to bf16 for the MXU; accumulate in f32, bias/ReLU
    # stay in f32 (v5e has no bf16 VPU).
    x = x_ref[...].astype(jnp.bfloat16)

    h = jnp.dot(x, w1_ref[...], preferred_element_type=jnp.float32)
    h = jnp.maximum(h + b1_ref[...], 0.0)

    h = jnp.dot(h.astype(jnp.bfloat16), w2_ref[...],
                preferred_element_type=jnp.float32)
    h = jnp.maximum(h + b2_ref[...], 0.0)

    h = jnp.dot(h.astype(jnp.bfloat16), w3_ref[...],
                preferred_element_type=jnp.float32)
    h = jnp.maximum(h + b3_ref[...], 0.0)

    q = jnp.dot(h.astype(jnp.bfloat16), w4_ref[...],
                preferred_element_type=jnp.float32)
    o_ref[...] = (q + b4_ref[...]).astype(o_ref.dtype)


# --------------------------------------------------------------------------
# Wrapper
# --------------------------------------------------------------------------
def _round_up(x, m):
    return ((x + m - 1) // m) * m


def _pad2(a, rows, cols):
    r, c = a.shape
    return jnp.pad(a, ((0, rows - r), (0, cols - c)))


def onehot_dqn_forward(state, params, *, tile_b=512):
    """state: (B, num_feats) f32; params: dict of w1..w4 (in,out) and b1..b4 (1,out)."""
    B, F = state.shape
    H = params["w1"].shape[1]
    A = params["w4"].shape[1]

    # Lane-dense padded dims (hidden + output features -> multiples of 128).
    H_pad = _round_up(max(H, 128), 128)
    A_pad = _round_up(max(A, 128), 128)

    # Batch tiling: pad B to a sublane-friendly multiple; weights stay
    # resident across grid steps, so big tiles just amortize per-step overhead.
    B_pad = _round_up(B, 8)
    if B_pad > tile_b:
        B_pad = _round_up(B, tile_b)
    else:
        tile_b = B_pad
    n_tiles = B_pad // tile_b

    bf16 = jnp.bfloat16
    state_p = _pad2(state.astype(jnp.float32), B_pad, F)
    w1 = _pad2(params["w1"], F, H_pad).astype(bf16)
    w2 = _pad2(params["w2"], H_pad, H_pad).astype(bf16)
    w3 = _pad2(params["w3"], H_pad, H_pad).astype(bf16)
    w4 = _pad2(params["w4"], H_pad, A_pad).astype(bf16)
    b1 = _pad2(params["b1"], 1, H_pad).astype(jnp.float32)
    b2 = _pad2(params["b2"], 1, H_pad).astype(jnp.float32)
    b3 = _pad2(params["b3"], 1, H_pad).astype(jnp.float32)
    b4 = _pad2(params["b4"], 1, A_pad).astype(jnp.float32)

    operands = (state_p, w1, b1, w2, b2, w3, b3, w4, b4)

    # Explicit specs (no late-binding lambdas). State/output move with the
    # batch grid index; all weights/biases are pinned to block (0, 0).
    def _resident(shape):
        return pl.BlockSpec(shape, lambda i: (0, 0))

    in_specs = [
        pl.BlockSpec((tile_b, F), lambda i: (i, 0)),   # state tile
        _resident((F, H_pad)), _resident((1, H_pad)),  # w1, b1
        _resident((H_pad, H_pad)), _resident((1, H_pad)),  # w2, b2
        _resident((H_pad, H_pad)), _resident((1, H_pad)),  # w3, b3
        _resident((H_pad, A_pad)), _resident((1, A_pad)),  # w4, b4
    ]
    out_spec = pl.BlockSpec((tile_b, A_pad), lambda i: (i, 0))

    flops = 2 * B_pad * (F * H_pad + H_pad * H_pad + H_pad * H_pad
                         + H_pad * A_pad)
    bytes_accessed = (sum(int(op.size) * op.dtype.itemsize for op in operands)
                      + B_pad * A_pad * 4)
    cost = pl.CostEstimate(flops=flops, transcendentals=0,
                           bytes_accessed=bytes_accessed)

    out = pl.pallas_call(
        _onehot_dqn_kernel,
        out_shape=jax.ShapeDtypeStruct((B_pad, A_pad), jnp.float32),
        grid=(n_tiles,),
        in_specs=in_specs,
        out_specs=out_spec,
        compiler_params=pltpu.CompilerParams(
            dimension_semantics=("parallel",)),
        cost_estimate=cost,
    )(*operands)

    return out[:B, :A]


# --------------------------------------------------------------------------
# Parameters + reference
# --------------------------------------------------------------------------
def init_params(key, num_feats, num_actions, hidden=64):
    """Deterministic synthetic parameters (PyTorch-style uniform init)."""
    def linear(key, fan_in, fan_out):
        kw, kb = jax.random.split(key)
        bound = 1.0 / jnp.sqrt(fan_in)
        # Stored as (in, out): equals PyTorch weight (out, in) transposed.
        w = jax.random.uniform(kw, (fan_in, fan_out), jnp.float32, -bound, bound)
        b = jax.random.uniform(kb, (1, fan_out), jnp.float32, -bound, bound)
        return w, b

    k1, k2, k3, k4 = jax.random.split(key, 4)
    w1, b1 = linear(k1, num_feats, hidden)
    w2, b2 = linear(k2, hidden, hidden)
    w3, b3 = linear(k3, hidden, hidden)
    w4, b4 = linear(k4, hidden, num_actions)
    return dict(w1=w1, b1=b1, w2=w2, b2=b2, w3=w3, b3=b3, w4=w4, b4=b4)


def reference_forward_bf16(state, p):
    """Pure-JAX reference with the same bf16-in / f32-accumulate arithmetic."""
    def lin(x, w, b):
        return jnp.dot(x.astype(jnp.bfloat16), w.astype(jnp.bfloat16),
                       preferred_element_type=jnp.float32) + b
    h = jnp.maximum(lin(state, p["w1"], p["b1"]), 0.0)
    h = jnp.maximum(lin(h, p["w2"], p["b2"]), 0.0)
    h = jnp.maximum(lin(h, p["w3"], p["b3"]), 0.0)
    return lin(h, p["w4"], p["b4"])


def reference_forward_f32(state, p):
    h = jnp.maximum(state @ p["w1"] + p["b1"], 0.0)
    h = jnp.maximum(h @ p["w2"] + p["b2"], 0.0)
    h = jnp.maximum(h @ p["w3"] + p["b3"], 0.0)
    return h @ p["w4"] + p["b4"]


# --------------------------------------------------------------------------
# Demo / self-test
# --------------------------------------------------------------------------
if __name__ == "__main__":
    key = jax.random.PRNGKey(0)
    k_params, k_state = jax.random.split(key)

    batch = 1000        # realistic DQN replay batch; non-multiple to test padding
    num_feats = 32      # num_inputs[0] (one-hot state dimension)
    num_actions = 4

    params = init_params(k_params, num_feats, num_actions)
    state = jax.random.normal(k_state, (batch, num_feats), jnp.float32)

    q_vals = onehot_dqn_forward(state, params, tile_b=512)
    q_vals = jax.block_until_ready(q_vals)
    assert q_vals.shape == (batch, num_actions)

    # Exact-semantics reference (same bf16 matmul emulation).
    ref_bf16 = reference_forward_bf16(state, params)
    assert jnp.allclose(q_vals, ref_bf16, atol=1e-3, rtol=1e-3), \
        "mismatch vs bf16-emulated reference"

    # Sanity vs. pure f32 torch semantics (looser: bf16 MXU inputs).
    ref_f32 = reference_forward_f32(state, params)
    assert jnp.allclose(q_vals, ref_f32, atol=5e-2, rtol=5e-2), \
        "mismatch vs f32 reference beyond bf16 tolerance"

    print("KERNEL_OK")
</pallas_src>

<mosaic_0001>
module attributes {stable_mosaic.version = 11 : i64} {
  func.func @_onehot_dqn_kernel(%arg0: i32, %arg1: memref<512x32xf32, #tpu.memory_space<vmem>>, %arg2: memref<32x128xbf16, #tpu.memory_space<vmem>>, %arg3: memref<1x128xf32, #tpu.memory_space<vmem>>, %arg4: memref<128x128xbf16, #tpu.memory_space<vmem>>, %arg5: memref<1x128xf32, #tpu.memory_space<vmem>>, %arg6: memref<128x128xbf16, #tpu.memory_space<vmem>>, %arg7: memref<1x128xf32, #tpu.memory_space<vmem>>, %arg8: memref<128x128xbf16, #tpu.memory_space<vmem>>, %arg9: memref<1x128xf32, #tpu.memory_space<vmem>>, %arg10: memref<512x128xf32, #tpu.memory_space<vmem>>) attributes {dimension_semantics = [#tpu.dimension_semantics<parallel>], iteration_bounds = array<i64: 2>, scalar_prefetch = 0 : i64, scratch_operands = 0 : i64, tpu.core_type = #tpu.core_type<tc>, window_params = [{transform_indices = @transform_0, window_bounds = array<i64: 512, 32>}, {pipeline_mode = #tpu.pipeline_mode<synchronous>, transform_indices = @transform_1, window_bounds = array<i64: 32, 128>}, {pipeline_mode = #tpu.pipeline_mode<synchronous>, transform_indices = @transform_2, window_bounds = array<i64: 1, 128>}, {pipeline_mode = #tpu.pipeline_mode<synchronous>, transform_indices = @transform_3, window_bounds = array<i64: 128, 128>}, {pipeline_mode = #tpu.pipeline_mode<synchronous>, transform_indices = @transform_4, window_bounds = array<i64: 1, 128>}, {pipeline_mode = #tpu.pipeline_mode<synchronous>, transform_indices = @transform_5, window_bounds = array<i64: 128, 128>}, {pipeline_mode = #tpu.pipeline_mode<synchronous>, transform_indices = @transform_6, window_bounds = array<i64: 1, 128>}, {pipeline_mode = #tpu.pipeline_mode<synchronous>, transform_indices = @transform_7, window_bounds = array<i64: 128, 128>}, {pipeline_mode = #tpu.pipeline_mode<synchronous>, transform_indices = @transform_8, window_bounds = array<i64: 1, 128>}, {transform_indices = @transform_9, window_bounds = array<i64: 512, 128>}]} {
    %c0 = arith.constant 0 : index
    %c0_0 = arith.constant 0 : index
    %0 = vector.load %arg1[%c0, %c0_0] : memref<512x32xf32, #tpu.memory_space<vmem>>, vector<512x32xf32>
    %1 = arith.truncf %0 : vector<512x32xf32> to vector<512x32xbf16>
    %c0_1 = arith.constant 0 : index
    %c0_2 = arith.constant 0 : index
    %2 = vector.load %arg2[%c0_1, %c0_2] : memref<32x128xbf16, #tpu.memory_space<vmem>>, vector<32x128xbf16>
    %cst = arith.constant dense<0.000000e+00> : vector<512x128xf32>
    %3 = tpu.matmul %1, %2, %cst {dimension_numbers = #tpu.dot_dimension_numbers<[1], [0], [0], [1], [0, 0, 1, 1], [], []>} : vector<512x32xbf16>, vector<32x128xbf16>, vector<512x128xf32> -> vector<512x128xf32>
    %c0_3 = arith.constant 0 : index
    %c0_4 = arith.constant 0 : index
    %4 = vector.load %arg3[%c0_3, %c0_4] : memref<1x128xf32, #tpu.memory_space<vmem>>, vector<1x128xf32>
    %5 = vector.broadcast %4 : vector<1x128xf32> to vector<512x128xf32>
    %6 = arith.addf %3, %5 : vector<512x128xf32>
    %cst_5 = arith.constant 0.000000e+00 : f32
    %7 = vector.broadcast %cst_5 : f32 to vector<512x128xf32>
    %8 = arith.maximumf %6, %7 : vector<512x128xf32>
    %9 = arith.truncf %8 : vector<512x128xf32> to vector<512x128xbf16>
    %c0_6 = arith.constant 0 : index
    %c0_7 = arith.constant 0 : index
    %10 = vector.load %arg4[%c0_6, %c0_7] : memref<128x128xbf16, #tpu.memory_space<vmem>>, vector<128x128xbf16>
    %cst_8 = arith.constant dense<0.000000e+00> : vector<512x128xf32>
    %11 = tpu.matmul %9, %10, %cst_8 {dimension_numbers = #tpu.dot_dimension_numbers<[1], [0], [0], [1], [0, 0, 1, 1], [], []>} : vector<512x128xbf16>, vector<128x128xbf16>, vector<512x128xf32> -> vector<512x128xf32>
    %c0_9 = arith.constant 0 : index
    %c0_10 = arith.constant 0 : index
    %12 = vector.load %arg5[%c0_9, %c0_10] : memref<1x128xf32, #tpu.memory_space<vmem>>, vector<1x128xf32>
    %13 = vector.broadcast %12 : vector<1x128xf32> to vector<512x128xf32>
    %14 = arith.addf %11, %13 : vector<512x128xf32>
    %cst_11 = arith.constant 0.000000e+00 : f32
    %15 = vector.broadcast %cst_11 : f32 to vector<512x128xf32>
    %16 = arith.maximumf %14, %15 : vector<512x128xf32>
    %17 = arith.truncf %16 : vector<512x128xf32> to vector<512x128xbf16>
    %c0_12 = arith.constant 0 : index
    %c0_13 = arith.constant 0 : index
    %18 = vector.load %arg6[%c0_12, %c0_13] : memref<128x128xbf16, #tpu.memory_space<vmem>>, vector<128x128xbf16>
    %cst_14 = arith.constant dense<0.000000e+00> : vector<512x128xf32>
    %19 = tpu.matmul %17, %18, %cst_14 {dimension_numbers = #tpu.dot_dimension_numbers<[1], [0], [0], [1], [0, 0, 1, 1], [], []>} : vector<512x128xbf16>, vector<128x128xbf16>, vector<512x128xf32> -> vector<512x128xf32>
    %c0_15 = arith.constant 0 : index
    %c0_16 = arith.constant 0 : index
    %20 = vector.load %arg7[%c0_15, %c0_16] : memref<1x128xf32, #tpu.memory_space<vmem>>, vector<1x128xf32>
    %21 = vector.broadcast %20 : vector<1x128xf32> to vector<512x128xf32>
    %22 = arith.addf %19, %21 : vector<512x128xf32>
    %cst_17 = arith.constant 0.000000e+00 : f32
    %23 = vector.broadcast %cst_17 : f32 to vector<512x128xf32>
    %24 = arith.maximumf %22, %23 : vector<512x128xf32>
    %25 = arith.truncf %24 : vector<512x128xf32> to vector<512x128xbf16>
    %c0_18 = arith.constant 0 : index
    %c0_19 = arith.constant 0 : index
    %26 = vector.load %arg8[%c0_18, %c0_19] : memref<128x128xbf16, #tpu.memory_space<vmem>>, vector<128x128xbf16>
    %cst_20 = arith.constant dense<0.000000e+00> : vector<512x128xf32>
    %27 = tpu.matmul %25, %26, %cst_20 {dimension_numbers = #tpu.dot_dimension_numbers<[1], [0], [0], [1], [0, 0, 1, 1], [], []>} : vector<512x128xbf16>, vector<128x128xbf16>, vector<512x128xf32> -> vector<512x128xf32>
    %c0_21 = arith.constant 0 : index
    %c0_22 = arith.constant 0 : index
    %28 = vector.load %arg9[%c0_21, %c0_22] : memref<1x128xf32, #tpu.memory_space<vmem>>, vector<1x128xf32>
    %29 = vector.broadcast %28 : vector<1x128xf32> to vector<512x128xf32>
    %30 = arith.addf %27, %29 : vector<512x128xf32>
    %c0_23 = arith.constant 0 : index
    %c0_24 = arith.constant 0 : index
    %31 = vector.load %arg10[%c0_23, %c0_24] : memref<512x128xf32, #tpu.memory_space<vmem>>, vector<512x128xf32>
    tpu.vector_store %arg10[%c0_23, %c0_24], %30 {strides = array<i32>} : memref<512x128xf32, #tpu.memory_space<vmem>>, vector<512x128xf32>,
    return
  }
  func.func @transform_0(%arg0: i32) -> (i32, i32) {
    %c0_i32 = arith.constant 0 : i32
    %c0_i32_0 = arith.constant 0 : i32
    return %arg0, %c0_i32 : i32, i32
  }
  func.func @transform_1(%arg0: i32) -> (i32, i32) {
    %c0_i32 = arith.constant 0 : i32
    %c0_i32_0 = arith.constant 0 : i32
    %c0_i32_1 = arith.constant 0 : i32
    return %c0_i32, %c0_i32_0 : i32, i32
  }
  func.func @transform_2(%arg0: i32) -> (i32, i32) {
    %c0_i32 = arith.constant 0 : i32
    %c0_i32_0 = arith.constant 0 : i32
    %c0_i32_1 = arith.constant 0 : i32
    return %c0_i32, %c0_i32_0 : i32, i32
  }
  func.func @transform_3(%arg0: i32) -> (i32, i32) {
    %c0_i32 = arith.constant 0 : i32
    %c0_i32_0 = arith.constant 0 : i32
    %c0_i32_1 = arith.constant 0 : i32
    return %c0_i32, %c0_i32_0 : i32, i32
  }
  func.func @transform_4(%arg0: i32) -> (i32, i32) {
    %c0_i32 = arith.constant 0 : i32
    %c0_i32_0 = arith.constant 0 : i32
    %c0_i32_1 = arith.constant 0 : i32
    return %c0_i32, %c0_i32_0 : i32, i32
  }
  func.func @transform_5(%arg0: i32) -> (i32, i32) {
    %c0_i32 = arith.constant 0 : i32
    %c0_i32_0 = arith.constant 0 : i32
    %c0_i32_1 = arith.constant 0 : i32
    return %c0_i32, %c0_i32_0 : i32, i32
  }
  func.func @transform_6(%arg0: i32) -> (i32, i32) {
    %c0_i32 = arith.constant 0 : i32
    %c0_i32_0 = arith.constant 0 : i32
    %c0_i32_1 = arith.constant 0 : i32
    return %c0_i32, %c0_i32_0 : i32, i32
  }
  func.func @transform_7(%arg0: i32) -> (i32, i32) {
    %c0_i32 = arith.constant 0 : i32
    %c0_i32_0 = arith.constant 0 : i32
    %c0_i32_1 = arith.constant 0 : i32
    return %c0_i32, %c0_i32_0 : i32, i32
  }
  func.func @transform_8(%arg0: i32) -> (i32, i32) {
    %c0_i32 = arith.constant 0 : i32
    %c0_i32_0 = arith.constant 0 : i32
    %c0_i32_1 = arith.constant 0 : i32
    return %c0_i32, %c0_i32_0 : i32, i32
  }
  func.func @transform_9(%arg0: i32) -> (i32, i32) {
    %c0_i32 = arith.constant 0 : i32
    %c0_i32_0 = arith.constant 0 : i32
    return %arg0, %c0_i32 : i32, i32
  }
}

</mosaic_0001>

<llo_original>
// kernel: tpu_custom_call.1
$region0: #{tpu_custom_call.1}
  #allocation0 [shape = 'u32[]', space=smem, size = 0x4, offset = 0x4, fixed_abs, tag = 'smem constant byte address 0x4 - core index']
  #allocation1 [shape = 'u32[144,128]{1,0:T(1,128)}', space=vmem, size = 0x12000, scoped, tag = 'internal scratch']
  %s0 = inlined_call_operand.vmem [shape: f32[1024,32], index: 0, kind: input, shape index: {}]
  %s1 = inlined_call_operand.vmem [shape: bf16[32,128], index: 1, kind: input, shape index: {}]
  %s2 = inlined_call_operand.vmem [shape: f32[1,128], index: 2, kind: input, shape index: {}]
  %s3 = inlined_call_operand.vmem [shape: bf16[128,128], index: 3, kind: input, shape index: {}]
  %s4 = inlined_call_operand.vmem [shape: f32[1,128], index: 4, kind: input, shape index: {}]
  %s5 = inlined_call_operand.vmem [shape: bf16[128,128], index: 5, kind: input, shape index: {}]
  %s6 = inlined_call_operand.vmem [shape: f32[1,128], index: 6, kind: input, shape index: {}]
  %s7 = inlined_call_operand.vmem [shape: bf16[128,128], index: 7, kind: input, shape index: {}]
  %s8 = inlined_call_operand.vmem [shape: f32[1,128], index: 8, kind: input, shape index: {}]
  %s9 = inlined_call_operand.hbm [shape: f32[1024,128], index: 9, kind: output, shape index: {}]
  %s10 = sld [smem:[#allocation0]]
  $region69: #{tpu_custom_call.1} parent=0
    _
  %s12 = ssub.s32 1, %s10
  %s13 = scalar_select 0, %s12, %s10
  $region1: #{tpu_custom_call.1} parent=0
    #allocation2 [shape = 'u8[524288]{0}', space=vmem, size = 0x80000, scoped, tag = 'output window, operand 0']
    #allocation3 [shape = 's32[2]{0}', space=sflag, size = 0x8, scoped, tag = 'scoped memory for tpu_custom_call.1']
    %14 = vsyncpa [#allocation3], 0
    %s15 = scalar_lea.sflag [#allocation3], 1
    %16 = vsyncpa %s15, 0
    loop: start=0, step=1, limit=4
    $region2: #{tpu_custom_call.1} parent=1 // loop_pre_header
      _
    $region3: #{tpu_custom_call.1} parent=1 // loop_header
      %s18 = sphi 0, %s22
      %p19 = scmp.ge.s32.totalorder %s18, 4
      %s28 = sphi 0, %s30
      %s31 = sphi 0, %s28
      %s32 = sphi 0, %s31
      %s48 = sphi 0, %s32
      %s52 = sphi 0, %s52
      %s54 = sphi 0, %s52
      %s55 = sphi 0, %s54
      %s69 = sphi 0, %s55
      %s73 = sphi 0, %s73
      %s75 = sphi 0, %s73
      %s76 = sphi 0, %s75
      %s90 = sphi 0, %s76
      %s94 = sphi 0, %s94
      %s96 = sphi 0, %s94
      %s97 = sphi 0, %s96
      %s111 = sphi 0, %s97
      %s115 = sphi 0, %s115
      %s117 = sphi 0, %s115
      %s118 = sphi 0, %s117
      %s132 = sphi 0, %s118
      %s136 = sphi 0, %s136
      %s138 = sphi 0, %s136
      %s139 = sphi 0, %s138
      %s153 = sphi 0, %s139
      %s157 = sphi 0, %s157
      %s159 = sphi 0, %s157
      %s160 = sphi 0, %s159
      %s174 = sphi 0, %s160
      %s178 = sphi 0, %s178
      %s180 = sphi 0, %s178
      %s181 = sphi 0, %s180
      %s195 = sphi 0, %s181
      %s199 = sphi 0, %s199
      %s201 = sphi 0, %s199
      %s202 = sphi 0, %s201
      %s216 = sphi 0, %s202
      %s222 = sphi 0, %s224
      %s225 = sphi 0, %s222
      %s226 = sphi 0, %s225
      %s242 = sphi 0, %s226
    $region4: #{tpu_custom_call.1} parent=1 // loop_header_branch
      %21 = sbr.rel (%p19) target = $region8
    $region5: #{tpu_custom_call.1} parent=1 // loop_body
      %s23 = ssub.s32 %s18, 1
      %s24 = ssub.s32 %s18, 2
      %s25 = sadd.s32 %s18, 1
      %s26 = ssub.s32 %s18, %s25
      %p27 = scmp.eq.s32.totalorder %s26, 0
      %s29 = sadd.s32 %s28, 1
      %s30 = scalar_select %p27, %s28, %s29
      %p33 = pneg %p27
      %p34 = scmp.eq.s32.totalorder %s18, 1
      %p35 = por %p33, %p34
      %p36 = scmp.ne.s32.totalorder %s28, %s31
      %p37 = scmp.eq.s32.totalorder %s18, 0
      %p38 = por %p36, %p37
      %p39 = scmp.ne.s32.totalorder %s28, %s31
      %p40 = scmp.eq.s32.totalorder %s23, 1
      %p41 = por %p39, %p40
      %p42 = scmp.ne.s32.totalorder %s31, %s32
      %p43 = scmp.eq.s32.totalorder %s23, 0
      %p44 = por %p42, %p43
      %p45 = scmp.ne.s32.totalorder %s31, %s32
      %p46 = scmp.eq.s32.totalorder %s24, 1
      %p47 = por %p45, %p46
      %p49 = scmp.ne.s32.totalorder %s32, %s48
      %p50 = scmp.eq.s32.totalorder %s24, 0
      %p51 = por %p49, %p50
      %s53 = sadd.s32 %s52, 1
      %p56 = scmp.eq.s32.totalorder %s18, 1
      %p57 = scmp.ne.s32.totalorder %s52, %s54
      %p58 = scmp.eq.s32.totalorder %s18, 0
      %p59 = por %p57, %p58
      %p60 = scmp.ne.s32.totalorder %s52, %s54
      %p61 = scmp.eq.s32.totalorder %s23, 1
      %p62 = por %p60, %p61
      %p63 = scmp.ne.s32.totalorder %s54, %s55
      %p64 = scmp.eq.s32.totalorder %s23, 0
      %p65 = por %p63, %p64
      %p66 = scmp.ne.s32.totalorder %s54, %s55
      %p67 = scmp.eq.s32.totalorder %s24, 1
      %p68 = por %p66, %p67
      %p70 = scmp.ne.s32.totalorder %s55, %s69
      %p71 = scmp.eq.s32.totalorder %s24, 0
      %p72 = por %p70, %p71
      %s74 = sadd.s32 %s73, 1
      %p77 = scmp.eq.s32.totalorder %s18, 1
      %p78 = scmp.ne.s32.totalorder %s73, %s75
      %p79 = scmp.eq.s32.totalorder %s18, 0
      %p80 = por %p78, %p79
      %p81 = scmp.ne.s32.totalorder %s73, %s75
      %p82 = scmp.eq.s32.totalorder %s23, 1
      %p83 = por %p81, %p82
      %p84 = scmp.ne.s32.totalorder %s75, %s76
      %p85 = scmp.eq.s32.totalorder %s23, 0
      %p86 = por %p84, %p85
      %p87 = scmp.ne.s32.totalorder %s75, %s76
      %p88 = scmp.eq.s32.totalorder %s24, 1
      %p89 = por %p87, %p88
      %p91 = scmp.ne.s32.totalorder %s76, %s90
      %p92 = scmp.eq.s32.totalorder %s24, 0
      %p93 = por %p91, %p92
      %s95 = sadd.s32 %s94, 1
      %p98 = scmp.eq.s32.totalorder %s18, 1
      %p99 = scmp.ne.s32.totalorder %s94, %s96
      %p100 = scmp.eq.s32.totalorder %s18, 0
      %p101 = por %p99, %p100
      %p102 = scmp.ne.s32.totalorder %s94, %s96
      %p103 = scmp.eq.s32.totalorder %s23, 1
      %p104 = por %p102, %p103
      %p105 = scmp.ne.s32.totalorder %s96, %s97
      %p106 = scmp.eq.s32.totalorder %s23, 0
      %p107 = por %p105, %p106
      %p108 = scmp.ne.s32.totalorder %s96, %s97
      %p109 = scmp.eq.s32.totalorder %s24, 1
      %p110 = por %p108, %p109
      %p112 = scmp.ne.s32.totalorder %s97, %s111
      %p113 = scmp.eq.s32.totalorder %s24, 0
      %p114 = por %p112, %p113
      %s116 = sadd.s32 %s115, 1
      %p119 = scmp.eq.s32.totalorder %s18, 1
      %p120 = scmp.ne.s32.totalorder %s115, %s117
      %p121 = scmp.eq.s32.totalorder %s18, 0
      %p122 = por %p120, %p121
      %p123 = scmp.ne.s32.totalorder %s115, %s117
      %p124 = scmp.eq.s32.totalorder %s23, 1
      %p125 = por %p123, %p124
      %p126 = scmp.ne.s32.totalorder %s117, %s118
      %p127 = scmp.eq.s32.totalorder %s23, 0
      %p128 = por %p126, %p127
      %p129 = scmp.ne.s32.totalorder %s117, %s118
      %p130 = scmp.eq.s32.totalorder %s24, 1
      %p131 = por %p129, %p130
      %p133 = scmp.ne.s32.totalorder %s118, %s132
      %p134 = scmp.eq.s32.totalorder %s24, 0
      %p135 = por %p133, %p134
      %s137 = sadd.s32 %s136, 1
      %p140 = scmp.eq.s32.totalorder %s18, 1
      %p141 = scmp.ne.s32.totalorder %s136, %s138
      %p142 = scmp.eq.s32.totalorder %s18, 0
      %p143 = por %p141, %p142
      %p144 = scmp.ne.s32.totalorder %s136, %s138
      %p145 = scmp.eq.s32.totalorder %s23, 1
      %p146 = por %p144, %p145
      %p147 = scmp.ne.s32.totalorder %s138, %s139
      %p148 = scmp.eq.s32.totalorder %s23, 0
      %p149 = por %p147, %p148
      %p150 = scmp.ne.s32.totalorder %s138, %s139
      %p151 = scmp.eq.s32.totalorder %s24, 1
      %p152 = por %p150, %p151
      %p154 = scmp.ne.s32.totalorder %s139, %s153
      %p155 = scmp.eq.s32.totalorder %s24, 0
      %p156 = por %p154, %p155
      %s158 = sadd.s32 %s157, 1
      %p161 = scmp.eq.s32.totalorder %s18, 1
      %p162 = scmp.ne.s32.totalorder %s157, %s159
      %p163 = scmp.eq.s32.totalorder %s18, 0
      %p164 = por %p162, %p163
      %p165 = scmp.ne.s32.totalorder %s157, %s159
      %p166 = scmp.eq.s32.totalorder %s23, 1
      %p167 = por %p165, %p166
      %p168 = scmp.ne.s32.totalorder %s159, %s160
      %p169 = scmp.eq.s32.totalorder %s23, 0
      %p170 = por %p168, %p169
      %p171 = scmp.ne.s32.totalorder %s159, %s160
      %p172 = scmp.eq.s32.totalorder %s24, 1
      %p173 = por %p171, %p172
      %p175 = scmp.ne.s32.totalorder %s160, %s174
      %p176 = scmp.eq.s32.totalorder %s24, 0
      %p177 = por %p175, %p176
      %s179 = sadd.s32 %s178, 1
      %p182 = scmp.eq.s32.totalorder %s18, 1
      %p183 = scmp.ne.s32.totalorder %s178, %s180
      %p184 = scmp.eq.s32.totalorder %s18, 0
      %p185 = por %p183, %p184
      %p186 = scmp.ne.s32.totalorder %s178, %s180
      %p187 = scmp.eq.s32.totalorder %s23, 1
      %p188 = por %p186, %p187
      %p189 = scmp.ne.s32.totalorder %s180, %s181
      %p190 = scmp.eq.s32.totalorder %s23, 0
      %p191 = por %p189, %p190
      %p192 = scmp.ne.s32.totalorder %s180, %s181
      %p193 = scmp.eq.s32.totalorder %s24, 1
      %p194 = por %p192, %p193
      %p196 = scmp.ne.s32.totalorder %s181, %s195
      %p197 = scmp.eq.s32.totalorder %s24, 0
      %p198 = por %p196, %p197
      %s200 = sadd.s32 %s199, 1
      %p203 = scmp.eq.s32.totalorder %s18, 1
      %p204 = scmp.ne.s32.totalorder %s199, %s201
      %p205 = scmp.eq.s32.totalorder %s18, 0
      %p206 = por %p204, %p205
      %p207 = scmp.ne.s32.totalorder %s199, %s201
      %p208 = scmp.eq.s32.totalorder %s23, 1
      %p209 = por %p207, %p208
      %p210 = scmp.ne.s32.totalorder %s201, %s202
      %p211 = scmp.eq.s32.totalorder %s23, 0
      %p212 = por %p210, %p211
      %p213 = scmp.ne.s32.totalorder %s201, %s202
      %p214 = scmp.eq.s32.totalorder %s24, 1
      %p215 = por %p213, %p214
      %p217 = scmp.ne.s32.totalorder %s202, %s216
      %p218 = scmp.eq.s32.totalorder %s24, 0
      %p219 = por %p217, %p218
      %s220 = ssub.s32 %s18, %s25
      %p221 = scmp.eq.s32.totalorder %s220, 0
      %s223 = sadd.s32 %s222, 1
      %s224 = scalar_select %p221, %s222, %s223
      %p227 = pneg %p221
      %p228 = scmp.eq.s32.totalorder %s18, 1
      %p229 = por %p227, %p228
      %p230 = scmp.ne.s32.totalorder %s222, %s225
      %p231 = scmp.eq.s32.totalorder %s18, 0
      %p232 = por %p230, %p231
      %p233 = scmp.ne.s32.totalorder %s222, %s225
      %p234 = scmp.eq.s32.totalorder %s23, 1
      %p235 = por %p233, %p234
      %p236 = scmp.ne.s32.totalorder %s225, %s226
      %p237 = scmp.eq.s32.totalorder %s23, 0
      %p238 = por %p236, %p237
      %p239 = scmp.ne.s32.totalorder %s225, %s226
      %p240 = scmp.eq.s32.totalorder %s24, 1
      %p241 = por %p239, %p240
      %p243 = scmp.ne.s32.totalorder %s226, %s242
      %p244 = scmp.eq.s32.totalorder %s24, 0
      %p245 = por %p243, %p244
      %p246 = scmp.le.s32.totalorder 1, %s18
      %p247 = scmp.lt.s32.totalorder %s18, 3
      %p248 = pnand %p246, %p247
      %p249 = pneg %p248
      // Predicated region
      $region9: #{tpu_custom_call.1} parent=5 // pred_check
        _
      $region10: #{tpu_custom_call.1} parent=5 // pred_check_branch
        %251 = sbr.rel (%p248) target = $region12
      $region11: #{tpu_custom_call.1} parent=5 // pred_region
        %s252 = ssub.s32 %s18, 1
        // Predicated region
        $region13: #{tpu_custom_call.1} parent=11 // pred_check
          %p253 = pneg %p65
        $region14: #{tpu_custom_call.1} parent=11 // pred_check_branch
          %255 = sbr.rel (%p253) target = $region16
        $region15: #{tpu_custom_call.1} parent=11 // pred_region
          _
        $region16: #{tpu_custom_call.1} parent=11 // pred_fallthru
          _
        // Predicated region
        $region17: #{tpu_custom_call.1} parent=11 // pred_check
          %p256 = pneg %p86
        $region18: #{tpu_custom_call.1} parent=11 // pred_check_branch
          %258 = sbr.rel (%p256) target = $region20
        $region19: #{tpu_custom_call.1} parent=11 // pred_region
          _
        $region20: #{tpu_custom_call.1} parent=11 // pred_fallthru
          _
        // Predicated region
        $region21: #{tpu_custom_call.1} parent=11 // pred_check
          %p259 = pneg %p107
        $region22: #{tpu_custom_call.1} parent=11 // pred_check_branch
          %261 = sbr.rel (%p259) target = $region24
        $region23: #{tpu_custom_call.1} parent=11 // pred_region
          _
        $region24: #{tpu_custom_call.1} parent=11 // pred_fallthru
          _
        // Predicated region
        $region25: #{tpu_custom_call.1} parent=11 // pred_check
          %p262 = pneg %p128
        $region26: #{tpu_custom_call.1} parent=11 // pred_check_branch
          %264 = sbr.rel (%p262) target = $region28
        $region27: #{tpu_custom_call.1} parent=11 // pred_region
          _
        $region28: #{tpu_custom_call.1} parent=11 // pred_fallthru
          _
        // Predicated region
        $region29: #{tpu_custom_call.1} parent=11 // pred_check
          %p265 = pneg %p149
        $region30: #{tpu_custom_call.1} parent=11 // pred_check_branch
          %267 = sbr.rel (%p265) target = $region32
        $region31: #{tpu_custom_call.1} parent=11 // pred_region
          _
        $region32: #{tpu_custom_call.1} parent=11 // pred_fallthru
          _
        // Predicated region
        $region33: #{tpu_custom_call.1} parent=11 // pred_check
          %p268 = pneg %p170
        $region34: #{tpu_custom_call.1} parent=11 // pred_check_branch
          %270 = sbr.rel (%p268) target = $region36
        $region35: #{tpu_custom_call.1} parent=11 // pred_region
          _
        $region36: #{tpu_custom_call.1} parent=11 // pred_fallthru
          _
        // Predicated region
        $region37: #{tpu_custom_call.1} parent=11 // pred_check
          %p271 = pneg %p191
        $region38: #{tpu_custom_call.1} parent=11 // pred_check_branch
          %273 = sbr.rel (%p271) target = $region40
        $region39: #{tpu_custom_call.1} parent=11 // pred_region
          _
        $region40: #{tpu_custom_call.1} parent=11 // pred_fallthru
          _
        // Predicated region
        $region41: #{tpu_custom_call.1} parent=11 // pred_check
          %p274 = pneg %p212
        $region42: #{tpu_custom_call.1} parent=11 // pred_check_branch
          %276 = sbr.rel (%p274) target = $region44
        $region43: #{tpu_custom_call.1} parent=11 // pred_region
          _
        $region44: #{tpu_custom_call.1} parent=11 // pred_fallthru
          _
      $region12: #{tpu_custom_call.1} parent=5 // pred_fallthru
        _
      %p277 = scmp.lt.s32.totalorder %s18, 2
      // Predicated region
      $region45: #{tpu_custom_call.1} parent=5 // pred_check
        %p278 = pneg %p277
      $region46: #{tpu_custom_call.1} parent=5 // pred_check_branch
        %280 = sbr.rel (%p278) target = $region48
      $region47: #{tpu_custom_call.1} parent=5 // pred_region
        // Predicated region
        $region49: #{tpu_custom_call.1} parent=47 // pred_check
          %p281 = pneg %p38
        $region50: #{tpu_custom_call.1} parent=47 // pred_check_branch
          %283 = sbr.rel (%p281) target = $region52
        $region51: #{tpu_custom_call.1} parent=47 // pred_region
          %s284 = smul.u32 64, %s18
          %p285 = scmp.lt.s32.totalorder %s284, 127
          %s286 = scalar_select %p285, %s284, 127
          %s287 = smul.addr %s286, 8
          %s288 = scalar_lea.vmem %s0, %s287
          %s289 = smul.u32 64, %s18
        $region52: #{tpu_custom_call.1} parent=47 // pred_fallthru
          _
      $region48: #{tpu_custom_call.1} parent=5 // pred_fallthru
        _
      %p290 = scmp.le.s32.totalorder 1, %s18
      %p291 = scmp.lt.s32.totalorder %s18, 3
      %p292 = pnand %p290, %p291
      %p293 = pneg %p292
      // Predicated region
      $region53: #{tpu_custom_call.1} parent=5 // pred_check
        _
      $region54: #{tpu_custom_call.1} parent=5 // pred_check_branch
        %295 = sbr.rel (%p292) target = $region56
      $region55: #{tpu_custom_call.1} parent=5 // pred_region
        %s296 = ssub.s32 %s18, 1
        %s297 = smul.u32 64, %s23
        %p298 = scmp.lt.s32.totalorder %s297, 127
        %s299 = scalar_select %p298, %s297, 127
        %s300 = smul.addr %s299, 8
        %s301 = scalar_lea.vmem %s0, %s300
        %p302 = pneg %p44
        %p303 = pneg %p41
        %p304 = pneg %p65
        %p305 = pneg %p62
        %p306 = pneg %p86
        %p307 = pneg %p83
        %p308 = pneg %p107
        %p309 = pneg %p104
        %p310 = pneg %p128
        %p311 = pneg %p125
        %p312 = pneg %p149
        %p313 = pneg %p146
        %p314 = pneg %p170
        %p315 = pneg %p167
        %p316 = pneg %p191
        %p317 = pneg %p188
        %p318 = pneg %p212
        %p319 = pneg %p209
        %p320 = pneg %p238
        %p321 = pneg %p235
        %s322 = sand.u32 %s225, 1
        %s323 = scalar_lea.sflag [#allocation3], %s322
        %s324 = sand.u32 %s225, 1
        %s325 = smul.addr %s324, 512
        %s326 = scalar_lea.vmem [#allocation2], %s325
        %s327 = smul.u32 64, %s23
        %p328 = scmp.lt.s32.totalorder %s327, 127
        %s329 = scalar_select %p328, %s327, 127
        %s330 = smul.addr %s329, 8
        %s331 = scalar_lea.vmem %s0, %s330
        %s332 = smul.u32 64, %s23
        %s333 = smul.u32 64, %s23
        %v335 = vld [vmem:[%s331] sm:$0xff]
        %v336 = vld [vmem:[%s331 + $0x8] sm:$0xff]
        %v337 = vld [vmem:[%s331 + $0x10] sm:$0xff]
        %v338 = vld [vmem:[%s331 + $0x18] sm:$0xff]
        %v339 = vld [vmem:[%s331 + $0x20] sm:$0xff]
        %v340 = vld [vmem:[%s331 + $0x28] sm:$0xff]
        %v341 = vld [vmem:[%s331 + $0x30] sm:$0xff]
        %v342 = vld [vmem:[%s331 + $0x38] sm:$0xff]
        %v343 = vld [vmem:[%s331 + $0x40] sm:$0xff]
        %v344 = vld [vmem:[%s331 + $0x48] sm:$0xff]
        %v345 = vld [vmem:[%s331 + $0x50] sm:$0xff]
        %v346 = vld [vmem:[%s331 + $0x58] sm:$0xff]
        %v347 = vld [vmem:[%s331 + $0x60] sm:$0xff]
        %v348 = vld [vmem:[%s331 + $0x68] sm:$0xff]
        %v349 = vld [vmem:[%s331 + $0x70] sm:$0xff]
        %v350 = vld [vmem:[%s331 + $0x78] sm:$0xff]
        %v351 = vld [vmem:[%s331 + $0x80] sm:$0xff]
        %v352 = vld [vmem:[%s331 + $0x88] sm:$0xff]
        %v353 = vld [vmem:[%s331 + $0x90] sm:$0xff]
        %v354 = vld [vmem:[%s331 + $0x98] sm:$0xff]
        %v355 = vld [vmem:[%s331 + $0xa0] sm:$0xff]
        %v356 = vld [vmem:[%s331 + $0xa8] sm:$0xff]
        %v357 = vld [vmem:[%s331 + $0xb0] sm:$0xff]
        %v358 = vld [vmem:[%s331 + $0xb8] sm:$0xff]
        %v359 = vld [vmem:[%s331 + $0xc0] sm:$0xff]
        %v360 = vld [vmem:[%s331 + $0xc8] sm:$0xff]
        %v361 = vld [vmem:[%s331 + $0xd0] sm:$0xff]
        %v362 = vld [vmem:[%s331 + $0xd8] sm:$0xff]
        %v363 = vld [vmem:[%s331 + $0xe0] sm:$0xff]
        %v364 = vld [vmem:[%s331 + $0xe8] sm:$0xff]
        %v365 = vld [vmem:[%s331 + $0xf0] sm:$0xff]
        %v366 = vld [vmem:[%s331 + $0xf8] sm:$0xff]
        %v367 = vld [vmem:[%s331 + $0x100] sm:$0xff]
        %v368 = vld [vmem:[%s331 + $0x108] sm:$0xff]
        %v369 = vld [vmem:[%s331 + $0x110] sm:$0xff]
        %v370 = vld [vmem:[%s331 + $0x118] sm:$0xff]
        %v371 = vld [vmem:[%s331 + $0x120] sm:$0xff]
        %v372 = vld [vmem:[%s331 + $0x128] sm:$0xff]
        %v373 = vld [vmem:[%s331 + $0x130] sm:$0xff]
        %v374 = vld [vmem:[%s331 + $0x138] sm:$0xff]
        %v375 = vld [vmem:[%s331 + $0x140] sm:$0xff]
        %v376 = vld [vmem:[%s331 + $0x148] sm:$0xff]
        %v377 = vld [vmem:[%s331 + $0x150] sm:$0xff]
        %v378 = vld [vmem:[%s331 + $0x158] sm:$0xff]
        %v379 = vld [vmem:[%s331 + $0x160] sm:$0xff]
        %v380 = vld [vmem:[%s331 + $0x168] sm:$0xff]
        %v381 = vld [vmem:[%s331 + $0x170] sm:$0xff]
        %v382 = vld [vmem:[%s331 + $0x178] sm:$0xff]
        %v383 = vld [vmem:[%s331 + $0x180] sm:$0xff]
        %v384 = vld [vmem:[%s331 + $0x188] sm:$0xff]
        %v385 = vld [vmem:[%s331 + $0x190] sm:$0xff]
        %v386 = vld [vmem:[%s331 + $0x198] sm:$0xff]
        %v387 = vld [vmem:[%s331 + $0x1a0] sm:$0xff]
        %v388 = vld [vmem:[%s331 + $0x1a8] sm:$0xff]
        %v389 = vld [vmem:[%s331 + $0x1b0] sm:$0xff]
        %v390 = vld [vmem:[%s331 + $0x1b8] sm:$0xff]
        %v391 = vld [vmem:[%s331 + $0x1c0] sm:$0xff]
        %v392 = vld [vmem:[%s331 + $0x1c8] sm:$0xff]
        %v393 = vld [vmem:[%s331 + $0x1d0] sm:$0xff]
        %v394 = vld [vmem:[%s331 + $0x1d8] sm:$0xff]
        %v395 = vld [vmem:[%s331 + $0x1e0] sm:$0xff]
        %v396 = vld [vmem:[%s331 + $0x1e8] sm:$0xff]
        %v397 = vld [vmem:[%s331 + $0x1f0] sm:$0xff]
        %v398 = vld [vmem:[%s331 + $0x1f8] sm:$0xff]
        %v399 = vpack.c.bf16 %v336, %v335
        %v400 = vpack.c.bf16 %v338, %v337
        %v401 = vpack.c.bf16 %v340, %v339
        %v402 = vpack.c.bf16 %v342, %v341
        %v403 = vpack.c.bf16 %v344, %v343
        %v404 = vpack.c.bf16 %v346, %v345
        %v405 = vpack.c.bf16 %v348, %v347
        %v406 = vpack.c.bf16 %v350, %v349
        %v407 = vpack.c.bf16 %v352, %v351
        %v408 = vpack.c.bf16 %v354, %v353
        %v409 = vpack.c.bf16 %v356, %v355
        %v410 = vpack.c.bf16 %v358, %v357
        %v411 = vpack.c.bf16 %v360, %v359
        %v412 = vpack.c.bf16 %v362, %v361
        %v413 = vpack.c.bf16 %v364, %v363
        %v414 = vpack.c.bf16 %v366, %v365
        %v415 = vpack.c.bf16 %v368, %v367
        %v416 = vpack.c.bf16 %v370, %v369
        %v417 = vpack.c.bf16 %v372, %v371
        %v418 = vpack.c.bf16 %v374, %v373
        %v419 = vpack.c.bf16 %v376, %v375
        %v420 = vpack.c.bf16 %v378, %v377
        %v421 = vpack.c.bf16 %v380, %v379
        %v422 = vpack.c.bf16 %v382, %v381
        %v423 = vpack.c.bf16 %v384, %v383
        %v424 = vpack.c.bf16 %v386, %v385
        %v425 = vpack.c.bf16 %v388, %v387
        %v426 = vpack.c.bf16 %v390, %v389
        %v427 = vpack.c.bf16 %v392, %v391
        %v428 = vpack.c.bf16 %v394, %v393
        %v429 = vpack.c.bf16 %v396, %v395
        %v430 = vpack.c.bf16 %v398, %v397
        %v431 = vld [vmem:[%s1] sm:$0xf]
        %v432 = vld [vmem:[%s1 + $0x4] sm:$0xf]
        %v433 = vld [vmem:[%s1 + $0x8] sm:$0xf]
        %v434 = vld [vmem:[%s1 + $0xc] sm:$0xf]
        %v435 = vld [vmem:[%s2] sm:$0x1]
        %v437 = vlaneseq
        %v438 = vshrl.u32 %v437, 7
        %v439 = vsub.s32 0, %v438
        %v440 = vrot.slane %v435, %v439
        %v446 = vunpack.c.l.b16 %v431
        %v447 = vunpack.c.l.b16 %v432
        %v448 = vunpack.c.l.b16 %v433
        %v449 = vunpack.c.l.b16 %v434
        %v450 = vpack.c.b16 %v447, %v446
        %v451 = vpack.c.b16 %v449, %v448
        %vm454 = vcmask 261120
        %v456 = vsel %vm454, %v399, 0
        %v459 = vsel %vm454, %v400, 0
        %v462 = vsel %vm454, %v401, 0
        %v465 = vsel %vm454, %v402, 0
        %v468 = vsel %vm454, %v403, 0
        %v471 = vsel %vm454, %v404, 0
        %v474 = vsel %vm454, %v405, 0
        %v477 = vsel %vm454, %v406, 0
        %v480 = vsel %vm454, %v407, 0
        %v483 = vsel %vm454, %v408, 0
        %v486 = vsel %vm454, %v409, 0
        %v489 = vsel %vm454, %v410, 0
        %v492 = vsel %vm454, %v411, 0
        %v495 = vsel %vm454, %v412, 0
        %v498 = vsel %vm454, %v413, 0
        %v501 = vsel %vm454, %v414, 0
        %v504 = vsel %vm454, %v415, 0
        %v507 = vsel %vm454, %v416, 0
        %v510 = vsel %vm454, %v417, 0
        %v513 = vsel %vm454, %v418, 0
        %v516 = vsel %vm454, %v419, 0
        %v519 = vsel %vm454, %v420, 0
        %v522 = vsel %vm454, %v421, 0
        %v525 = vsel %vm454, %v422, 0
        %v528 = vsel %vm454, %v423, 0
        %v531 = vsel %vm454, %v424, 0
        %v534 = vsel %vm454, %v425, 0
        %v537 = vsel %vm454, %v426, 0
        %v540 = vsel %vm454, %v427, 0
        %v543 = vsel %vm454, %v428, 0
        %v546 = vsel %vm454, %v429, 0
        %v549 = vsel %vm454, %v430, 0
        %551 = vmatprep.subr.bf16.mxu0 0
        %552 = vmatpush1.bf16.msra.mxu0 %v450
        %553 = vmatprep.subr.bf16.mxu0 0
        %554 = vmatpush1.bf16.msra.mxu0 %v451
        %555 = vmatprep.subr.bf16.mxu0 0
        %556 = vmatpush1.bf16.msra.mxu0 0
        %557 = vmatprep.subr.bf16.mxu0 0
        %558 = vmatpush1.bf16.msra.mxu0 0
        %559 = vmatprep.subr.bf16.mxu0 0
        %560 = vmatpush1.bf16.msra.mxu0 0
        %561 = vmatprep.subr.bf16.mxu0 0
        %562 = vmatpush1.bf16.msra.mxu0 0
        %563 = vmatprep.subr.bf16.mxu0 0
        %564 = vmatpush1.bf16.msra.mxu0 0
        %565 = vmatprep.subr.bf16.mxu0 0
        %566 = vmatpush1.bf16.msra.mxu0 0
        %567 = vmatprep.subr.bf16.mxu0 0
        %568 = vmatpush1.bf16.msra.mxu0 0
        %569 = vmatprep.subr.bf16.mxu0 0
        %570 = vmatpush1.bf16.msra.mxu0 0
        %571 = vmatprep.subr.bf16.mxu0 0
        %572 = vmatpush1.bf16.msra.mxu0 0
        %573 = vmatprep.subr.bf16.mxu0 0
        %574 = vmatpush1.bf16.msra.mxu0 0
        %575 = vmatprep.subr.bf16.mxu0 0
        %576 = vmatpush1.bf16.msra.mxu0 0
        %577 = vmatprep.subr.bf16.mxu0 0
        %578 = vmatpush1.bf16.msra.mxu0 0
        %579 = vmatprep.subr.bf16.mxu0 0
        %580 = vmatpush1.bf16.msra.mxu0 0
        %581 = vmatprep.subr.bf16.mxu0 0
        %582 = vmatpush1.bf16.msra.mxu0 0
        %583 = vmatprep.mubr.bf16.mxu0 0
        %584 = vmatmul.mubr.bf16.gmra.mrb[0].mxu0 %v456
        %v585 = vpop.f32.mrb[0].mxu0
        %v586 = vadd.f32 %v440, %v585
        %v587 = vpop.f32.mrb[0].mxu0
        %v588 = vpop.f32.mrb[0].mxu0
        %v589 = vadd.f32 %v440, %v588
        %v590 = vpop.f32.mrb[0].mxu0
        %591 = vmatprep.mubr.bf16.mxu0 0
        %592 = vmatmul.mubr.bf16.gmra.mrb[0].mxu0 %v459
        %v593 = vpop.f32.mrb[0].mxu0
        %v594 = vadd.f32 %v440, %v593
        %v595 = vpop.f32.mrb[0].mxu0
        %v596 = vpop.f32.mrb[0].mxu0
        %v597 = vadd.f32 %v440, %v596
        %v598 = vpop.f32.mrb[0].mxu0
        %599 = vmatprep.mubr.bf16.mxu0 0
        %600 = vmatmul.mubr.bf16.gmra.mrb[0].mxu0 %v462
        %v601 = vpop.f32.mrb[0].mxu0
        %v602 = vadd.f32 %v440, %v601
        %v603 = vpop.f32.mrb[0].mxu0
        %v604 = vpop.f32.mrb[0].mxu0
        %v605 = vadd.f32 %v440, %v604
        %v606 = vpop.f32.mrb[0].mxu0
        %607 = vmatprep.mubr.bf16.mxu0 0
        %608 = vmatmul.mubr.bf16.gmra.mrb[0].mxu0 %v465
        %v609 = vpop.f32.mrb[0].mxu0
        %v610 = vadd.f32 %v440, %v609
        %v611 = vpop.f32.mrb[0].mxu0
        %v612 = vpop.f32.mrb[0].mxu0
        %v613 = vadd.f32 %v440, %v612
        %v614 = vpop.f32.mrb[0].mxu0
        %615 = vmatprep.mubr.bf16.mxu0 0
        %616 = vmatmul.mubr.bf16.gmra.mrb[0].mxu0 %v468
        %v617 = vpop.f32.mrb[0].mxu0
        %v618 = vadd.f32 %v440, %v617
        %v619 = vpop.f32.mrb[0].mxu0
        %v620 = vpop.f32.mrb[0].mxu0
        %v621 = vadd.f32 %v440, %v620
        %v622 = vpop.f32.mrb[0].mxu0
        %623 = vmatprep.mubr.bf16.mxu0 0
        %624 = vmatmul.mubr.bf16.gmra.mrb[0].mxu0 %v471
        %v625 = vpop.f32.mrb[0].mxu0
        %v626 = vadd.f32 %v440, %v625
        %v627 = vpop.f32.mrb[0].mxu0
        %v628 = vpop.f32.mrb[0].mxu0
        %v629 = vadd.f32 %v440, %v628
        %v630 = vpop.f32.mrb[0].mxu0
        %631 = vmatprep.mubr.bf16.mxu0 0
        %632 = vmatmul.mubr.bf16.gmra.mrb[0].mxu0 %v474
        %v633 = vpop.f32.mrb[0].mxu0
        %v634 = vadd.f32 %v440, %v633
        %v635 = vpop.f32.mrb[0].mxu0
        %v636 = vpop.f32.mrb[0].mxu0
        %v637 = vadd.f32 %v440, %v636
        %v638 = vpop.f32.mrb[0].mxu0
        %639 = vmatprep.mubr.bf16.mxu0 0
        %640 = vmatmul.mubr.bf16.gmra.mrb[0].mxu0 %v477
        %v641 = vpop.f32.mrb[0].mxu0
        %v642 = vadd.f32 %v440, %v641
        %v643 = vpop.f32.mrb[0].mxu0
        %v644 = vpop.f32.mrb[0].mxu0
        %v645 = vadd.f32 %v440, %v644
        %v646 = vpop.f32.mrb[0].mxu0
        %647 = vmatprep.mubr.bf16.mxu0 0
        %648 = vmatmul.mubr.bf16.gmra.mrb[0].mxu0 %v480
        %v649 = vpop.f32.mrb[0].mxu0
        %v650 = vadd.f32 %v440, %v649
        %v651 = vpop.f32.mrb[0].mxu0
        %v652 = vpop.f32.mrb[0].mxu0
        %v653 = vadd.f32 %v440, %v652
        %v654 = vpop.f32.mrb[0].mxu0
        %655 = vmatprep.mubr.bf16.mxu0 0
        %656 = vmatmul.mubr.bf16.gmra.mrb[0].mxu0 %v483
        %v657 = vpop.f32.mrb[0].mxu0
        %v658 = vadd.f32 %v440, %v657
        %v659 = vpop.f32.mrb[0].mxu0
        %v660 = vpop.f32.mrb[0].mxu0
        %v661 = vadd.f32 %v440, %v660
        %v662 = vpop.f32.mrb[0].mxu0
        %663 = vmatprep.mubr.bf16.mxu0 0
        %664 = vmatmul.mubr.bf16.gmra.mrb[0].mxu0 %v486
        %v665 = vpop.f32.mrb[0].mxu0
        %v666 = vadd.f32 %v440, %v665
        %v667 = vpop.f32.mrb[0].mxu0
        %v668 = vpop.f32.mrb[0].mxu0
        %v669 = vadd.f32 %v440, %v668
        %v670 = vpop.f32.mrb[0].mxu0
        %671 = vmatprep.mubr.bf16.mxu0 0
        %672 = vmatmul.mubr.bf16.gmra.mrb[0].mxu0 %v489
        %v673 = vpop.f32.mrb[0].mxu0
        %v674 = vadd.f32 %v440, %v673
        %v675 = vpop.f32.mrb[0].mxu0
        %v676 = vpop.f32.mrb[0].mxu0
        %v677 = vadd.f32 %v440, %v676
        %v678 = vpop.f32.mrb[0].mxu0
        %679 = vmatprep.mubr.bf16.mxu0 0
        %680 = vmatmul.mubr.bf16.gmra.mrb[0].mxu0 %v492
        %v681 = vpop.f32.mrb[0].mxu0
        %v682 = vadd.f32 %v440, %v681
        %v683 = vpop.f32.mrb[0].mxu0
        %v684 = vpop.f32.mrb[0].mxu0
        %v685 = vadd.f32 %v440, %v684
        %v686 = vpop.f32.mrb[0].mxu0
        %687 = vmatprep.mubr.bf16.mxu0 0
        %688 = vmatmul.mubr.bf16.gmra.mrb[0].mxu0 %v495
        %v689 = vpop.f32.mrb[0].mxu0
        %v690 = vadd.f32 %v440, %v689
        %v691 = vpop.f32.mrb[0].mxu0
        %v692 = vpop.f32.mrb[0].mxu0
        %v693 = vadd.f32 %v440, %v692
        %v694 = vpop.f32.mrb[0].mxu0
        %695 = vmatprep.mubr.bf16.mxu0 0
        %696 = vmatmul.mubr.bf16.gmra.mrb[0].mxu0 %v498
        %v697 = vpop.f32.mrb[0].mxu0
        %v698 = vadd.f32 %v440, %v697
        %v699 = vpop.f32.mrb[0].mxu0
        %v700 = vpop.f32.mrb[0].mxu0
        %v701 = vadd.f32 %v440, %v700
        %v702 = vpop.f32.mrb[0].mxu0
        %703 = vmatprep.mubr.bf16.mxu0 0
        %704 = vmatmul.mubr.bf16.gmra.mrb[0].mxu0 %v501
        %v705 = vpop.f32.mrb[0].mxu0
        %v706 = vadd.f32 %v440, %v705
        %v707 = vpop.f32.mrb[0].mxu0
        %v708 = vpop.f32.mrb[0].mxu0
        %v709 = vadd.f32 %v440, %v708
        %v710 = vpop.f32.mrb[0].mxu0
        %711 = vmatprep.mubr.bf16.mxu0 0
        %712 = vmatmul.mubr.bf16.gmra.mrb[0].mxu0 %v504
        %v713 = vpop.f32.mrb[0].mxu0
        %v714 = vadd.f32 %v440, %v713
        %v715 = vpop.f32.mrb[0].mxu0
        %v716 = vpop.f32.mrb[0].mxu0
        %v717 = vadd.f32 %v440, %v716
        %v718 = vpop.f32.mrb[0].mxu0
        %719 = vmatprep.mubr.bf16.mxu0 0
        %720 = vmatmul.mubr.bf16.gmra.mrb[0].mxu0 %v507
        %v721 = vpop.f32.mrb[0].mxu0
        %v722 = vadd.f32 %v440, %v721
        %v723 = vpop.f32.mrb[0].mxu0
        %v724 = vpop.f32.mrb[0].mxu0
        %v725 = vadd.f32 %v440, %v724
        %v726 = vpop.f32.mrb[0].mxu0
        %727 = vmatprep.mubr.bf16.mxu0 0
        %728 = vmatmul.mubr.bf16.gmra.mrb[0].mxu0 %v510
        %v729 = vpop.f32.mrb[0].mxu0
        %v730 = vadd.f32 %v440, %v729
        %v731 = vpop.f32.mrb[0].mxu0
        %v732 = vpop.f32.mrb[0].mxu0
        %v733 = vadd.f32 %v440, %v732
        %v734 = vpop.f32.mrb[0].mxu0
        %735 = vmatprep.mubr.bf16.mxu0 0
        %736 = vmatmul.mubr.bf16.gmra.mrb[0].mxu0 %v513
        %v737 = vpop.f32.mrb[0].mxu0
        %v738 = vadd.f32 %v440, %v737
        %v739 = vpop.f32.mrb[0].mxu0
        %v740 = vpop.f32.mrb[0].mxu0
        %v741 = vadd.f32 %v440, %v740
        %v742 = vpop.f32.mrb[0].mxu0
        %743 = vmatprep.mubr.bf16.mxu0 0
        %744 = vmatmul.mubr.bf16.gmra.mrb[0].mxu0 %v516
        %v745 = vpop.f32.mrb[0].mxu0
        %v746 = vadd.f32 %v440, %v745
        %v747 = vpop.f32.mrb[0].mxu0
        %v748 = vpop.f32.mrb[0].mxu0
        %v749 = vadd.f32 %v440, %v748
        %v750 = vpop.f32.mrb[0].mxu0
        %751 = vmatprep.mubr.bf16.mxu0 0
        %752 = vmatmul.mubr.bf16.gmra.mrb[0].mxu0 %v519
        %v753 = vpop.f32.mrb[0].mxu0
        %v754 = vadd.f32 %v440, %v753
        %v755 = vpop.f32.mrb[0].mxu0
        %v756 = vpop.f32.mrb[0].mxu0
        %v757 = vadd.f32 %v440, %v756
        %v758 = vpop.f32.mrb[0].mxu0
        %759 = vmatprep.mubr.bf16.mxu0 0
        %760 = vmatmul.mubr.bf16.gmra.mrb[0].mxu0 %v522
        %v761 = vpop.f32.mrb[0].mxu0
        %v762 = vadd.f32 %v440, %v761
        %v763 = vpop.f32.mrb[0].mxu0
        %v764 = vpop.f32.mrb[0].mxu0
        %v765 = vadd.f32 %v440, %v764
        %v766 = vpop.f32.mrb[0].mxu0
        %767 = vmatprep.mubr.bf16.mxu0 0
        %768 = vmatmul.mubr.bf16.gmra.mrb[0].mxu0 %v525
        %v769 = vpop.f32.mrb[0].mxu0
        %v770 = vadd.f32 %v440, %v769
        %v771 = vpop.f32.mrb[0].mxu0
        %v772 = vpop.f32.mrb[0].mxu0
        %v773 = vadd.f32 %v440, %v772
        %v774 = vpop.f32.mrb[0].mxu0
        %775 = vmatprep.mubr.bf16.mxu0 0
        %776 = vmatmul.mubr.bf16.gmra.mrb[0].mxu0 %v528
        %v777 = vpop.f32.mrb[0].mxu0
        %v778 = vadd.f32 %v440, %v777
        %v779 = vpop.f32.mrb[0].mxu0
        %v780 = vpop.f32.mrb[0].mxu0
        %v781 = vadd.f32 %v440, %v780
        %v782 = vpop.f32.mrb[0].mxu0
        %783 = vmatprep.mubr.bf16.mxu0 0
        %784 = vmatmul.mubr.bf16.gmra.mrb[0].mxu0 %v531
        %v785 = vpop.f32.mrb[0].mxu0
        %v786 = vadd.f32 %v440, %v785
        %v787 = vpop.f32.mrb[0].mxu0
        %v788 = vpop.f32.mrb[0].mxu0
        %v789 = vadd.f32 %v440, %v788
        %v790 = vpop.f32.mrb[0].mxu0
        %791 = vmatprep.mubr.bf16.mxu0 0
        %792 = vmatmul.mubr.bf16.gmra.mrb[0].mxu0 %v534
        %v793 = vpop.f32.mrb[0].mxu0
        %v794 = vadd.f32 %v440, %v793
        %v795 = vpop.f32.mrb[0].mxu0
        %v796 = vpop.f32.mrb[0].mxu0
        %v797 = vadd.f32 %v440, %v796
        %v798 = vpop.f32.mrb[0].mxu0
        %799 = vmatprep.mubr.bf16.mxu0 0
        %800 = vmatmul.mubr.bf16.gmra.mrb[0].mxu0 %v537
        %v801 = vpop.f32.mrb[0].mxu0
        %v802 = vadd.f32 %v440, %v801
        %v803 = vpop.f32.mrb[0].mxu0
        %v804 = vpop.f32.mrb[0].mxu0
        %v805 = vadd.f32 %v440, %v804
        %v806 = vpop.f32.mrb[0].mxu0
        %807 = vmatprep.mubr.bf16.mxu0 0
        %808 = vmatmul.mubr.bf16.gmra.mrb[0].mxu0 %v540
        %v809 = vpop.f32.mrb[0].mxu0
        %v810 = vadd.f32 %v440, %v809
        %v811 = vpop.f32.mrb[0].mxu0
        %v812 = vpop.f32.mrb[0].mxu0
        %v813 = vadd.f32 %v440, %v812
        %v814 = vpop.f32.mrb[0].mxu0
        %815 = vmatprep.mubr.bf16.mxu0 0
        %816 = vmatmul.mubr.bf16.gmra.mrb[0].mxu0 %v543
        %v817 = vpop.f32.mrb[0].mxu0
        %v818 = vadd.f32 %v440, %v817
        %v819 = vpop.f32.mrb[0].mxu0
        %v820 = vpop.f32.mrb[0].mxu0
        %v821 = vadd.f32 %v440, %v820
        %v822 = vpop.f32.mrb[0].mxu0
        %823 = vmatprep.mubr.bf16.mxu0 0
        %824 = vmatmul.mubr.bf16.gmra.mrb[0].mxu0 %v546
        %v825 = vpop.f32.mrb[0].mxu0
        %v826 = vadd.f32 %v440, %v825
        %v827 = vpop.f32.mrb[0].mxu0
        %v828 = vpop.f32.mrb[0].mxu0
        %v829 = vadd.f32 %v440, %v828
        %v830 = vpop.f32.mrb[0].mxu0
        %831 = vmatprep.mubr.bf16.mxu0 0
        %832 = vmatmul.mubr.bf16.gmra.mrb[0].mxu0 %v549
        %v833 = vpop.f32.mrb[0].mxu0
        %v834 = vadd.f32 %v440, %v833
        %v835 = vpop.f32.mrb[0].mxu0
        %v836 = vpop.f32.mrb[0].mxu0
        %v837 = vadd.f32 %v440, %v836
        %v838 = vpop.f32.mrb[0].mxu0
        %839 = vdwg.mxu0
        %v840 = vmax.f32 %v586, 0.0
        %v841 = vmax.f32 %v589, 0.0
        %v842 = vmax.f32 %v594, 0.0
        %v843 = vmax.f32 %v597, 0.0
        %v844 = vmax.f32 %v602, 0.0
        %v845 = vmax.f32 %v605, 0.0
        %v846 = vmax.f32 %v610, 0.0
        %v847 = vmax.f32 %v613, 0.0
        %v848 = vmax.f32 %v618, 0.0
        %v849 = vmax.f32 %v621, 0.0
        %v850 = vmax.f32 %v626, 0.0
        %v851 = vmax.f32 %v629, 0.0
        %v852 = vmax.f32 %v634, 0.0
        %v853 = vmax.f32 %v637, 0.0
        %v854 = vmax.f32 %v642, 0.0
        %v855 = vmax.f32 %v645, 0.0
        %v856 = vmax.f32 %v650, 0.0
        %v857 = vmax.f32 %v653, 0.0
        %v858 = vmax.f32 %v658, 0.0
        %v859 = vmax.f32 %v661, 0.0
        %v860 = vmax.f32 %v666, 0.0
        %v861 = vmax.f32 %v669, 0.0
        %v862 = vmax.f32 %v674, 0.0
        %v863 = vmax.f32 %v677, 0.0
        %v864 = vmax.f32 %v682, 0.0
        %v865 = vmax.f32 %v685, 0.0
        %v866 = vmax.f32 %v690, 0.0
        %v867 = vmax.f32 %v693, 0.0
        %v868 = vmax.f32 %v698, 0.0
        %v869 = vmax.f32 %v701, 0.0
        %v870 = vmax.f32 %v706, 0.0
        %v871 = vmax.f32 %v709, 0.0
        %v872 = vmax.f32 %v714, 0.0
        %v873 = vmax.f32 %v717, 0.0
        %v874 = vmax.f32 %v722, 0.0
        %v875 = vmax.f32 %v725, 0.0
        %v876 = vmax.f32 %v730, 0.0
        %v877 = vmax.f32 %v733, 0.0
        %v878 = vmax.f32 %v738, 0.0
        %v879 = vmax.f32 %v741, 0.0
        %v880 = vmax.f32 %v746, 0.0
        %v881 = vmax.f32 %v749, 0.0
        %v882 = vmax.f32 %v754, 0.0
        %v883 = vmax.f32 %v757, 0.0
        %v884 = vmax.f32 %v762, 0.0
        %v885 = vmax.f32 %v765, 0.0
        %v886 = vmax.f32 %v770, 0.0
        %v887 = vmax.f32 %v773, 0.0
        %v888 = vmax.f32 %v778, 0.0
        %v889 = vmax.f32 %v781, 0.0
        %v890 = vmax.f32 %v786, 0.0
        %v891 = vmax.f32 %v789, 0.0
        %v892 = vmax.f32 %v794, 0.0
        %v893 = vmax.f32 %v797, 0.0
        %v894 = vmax.f32 %v802, 0.0
        %v895 = vmax.f32 %v805, 0.0
        %v896 = vmax.f32 %v810, 0.0
        %v897 = vmax.f32 %v813, 0.0
        %v898 = vmax.f32 %v818, 0.0
        %v899 = vmax.f32 %v821, 0.0
        %v900 = vmax.f32 %v826, 0.0
        %v901 = vmax.f32 %v829, 0.0
        %v902 = vmax.f32 %v834, 0.0
        %v903 = vmax.f32 %v837, 0.0
        %v904 = vpack.c.bf16 %v841, %v840
        %v905 = vpack.c.bf16 %v843, %v842
        %v906 = vpack.c.bf16 %v845, %v844
        %v907 = vpack.c.bf16 %v847, %v846
        %v908 = vpack.c.bf16 %v849, %v848
        %v909 = vpack.c.bf16 %v851, %v850
        %v910 = vpack.c.bf16 %v853, %v852
        %v911 = vpack.c.bf16 %v855, %v854
        %v912 = vpack.c.bf16 %v857, %v856
        %v913 = vpack.c.bf16 %v859, %v858
        %v914 = vpack.c.bf16 %v861, %v860
        %v915 = vpack.c.bf16 %v863, %v862
        %v916 = vpack.c.bf16 %v865, %v864
        %v917 = vpack.c.bf16 %v867, %v866
        %v918 = vpack.c.bf16 %v869, %v868
        %v919 = vpack.c.bf16 %v871, %v870
        %v920 = vpack.c.bf16 %v873, %v872
        %v921 = vpack.c.bf16 %v875, %v874
        %v922 = vpack.c.bf16 %v877, %v876
        %v923 = vpack.c.bf16 %v879, %v878
        %v924 = vpack.c.bf16 %v881, %v880
        %v925 = vpack.c.bf16 %v883, %v882
        %v926 = vpack.c.bf16 %v885, %v884
        %v927 = vpack.c.bf16 %v887, %v886
        %v928 = vpack.c.bf16 %v889, %v888
        %v929 = vpack.c.bf16 %v891, %v890
        %v930 = vpack.c.bf16 %v893, %v892
        %v931 = vpack.c.bf16 %v895, %v894
        %v932 = vpack.c.bf16 %v897, %v896
        %v933 = vpack.c.bf16 %v899, %v898
        %v934 = vpack.c.bf16 %v901, %v900
        %v935 = vpack.c.bf16 %v903, %v902
        %v936 = vld [vmem:[%s3] sm:$0xf]
        %v937 = vld [vmem:[%s3 + $0x4] sm:$0xf]
        %v938 = vld [vmem:[%s3 + $0x8] sm:$0xf]
        %v939 = vld [vmem:[%s3 + $0xc] sm:$0xf]
        %v940 = vld [vmem:[%s3 + $0x10] sm:$0xf]
        %v941 = vld [vmem:[%s3 + $0x14] sm:$0xf]
        %v942 = vld [vmem:[%s3 + $0x18] sm:$0xf]
        %v943 = vld [vmem:[%s3 + $0x1c] sm:$0xf]
        %v944 = vld [vmem:[%s3 + $0x20] sm:$0xf]
        %v945 = vld [vmem:[%s3 + $0x24] sm:$0xf]
        %v946 = vld [vmem:[%s3 + $0x28] sm:$0xf]
        %v947 = vld [vmem:[%s3 + $0x2c] sm:$0xf]
        %v948 = vld [vmem:[%s3 + $0x30] sm:$0xf]
        %v949 = vld [vmem:[%s3 + $0x34] sm:$0xf]
        %v950 = vld [vmem:[%s3 + $0x38] sm:$0xf]
        %v951 = vld [vmem:[%s3 + $0x3c] sm:$0xf]
        %v952 = vld [vmem:[%s4] sm:$0x1]
        %v954 = vlaneseq
        %v955 = vshrl.u32 %v954, 7
        %v956 = vsub.s32 0, %v955
        %v957 = vrot.slane %v952, %v956
        %v975 = vunpack.c.l.b16 %v936
        %v976 = vunpack.c.l.b16 %v937
        %v977 = vunpack.c.l.b16 %v938
        %v978 = vunpack.c.l.b16 %v939
        %v979 = vunpack.c.l.b16 %v940
        %v980 = vunpack.c.l.b16 %v941
        %v981 = vunpack.c.l.b16 %v942
        %v982 = vunpack.c.l.b16 %v943
        %v983 = vunpack.c.l.b16 %v944
        %v984 = vunpack.c.l.b16 %v945
        %v985 = vunpack.c.l.b16 %v946
        %v986 = vunpack.c.l.b16 %v947
        %v987 = vunpack.c.l.b16 %v948
        %v988 = vunpack.c.l.b16 %v949
        %v989 = vunpack.c.l.b16 %v950
        %v990 = vunpack.c.l.b16 %v951
        %v991 = vpack.c.b16 %v976, %v975
        %v992 = vpack.c.b16 %v978, %v977
        %v993 = vpack.c.b16 %v980, %v979
        %v994 = vpack.c.b16 %v982, %v981
        %v995 = vpack.c.b16 %v984, %v983
        %v996 = vpack.c.b16 %v986, %v985
        %v997 = vpack.c.b16 %v988, %v987
        %v998 = vpack.c.b16 %v990, %v989
        %1007 = vmatprep.subr.bf16.mxu0 0
        %1008 = vmatpush1.bf16.msra.mxu0 %v991
        %1009 = vmatprep.subr.bf16.mxu0 0
        %1010 = vmatpush1.bf16.msra.mxu0 %v992
        %1011 = vmatprep.subr.bf16.mxu0 0
        %1012 = vmatpush1.bf16.msra.mxu0 %v993
        %1013 = vmatprep.subr.bf16.mxu0 0
        %1014 = vmatpush1.bf16.msra.mxu0 %v994
        %1015 = vmatprep.subr.bf16.mxu0 0
        %1016 = vmatpush1.bf16.msra.mxu0 %v995
        %1017 = vmatprep.subr.bf16.mxu0 0
        %1018 = vmatpush1.bf16.msra.mxu0 %v996
        %1019 = vmatprep.subr.bf16.mxu0 0
        %1020 = vmatpush1.bf16.msra.mxu0 %v997
        %1021 = vmatprep.subr.bf16.mxu0 0
        %1022 = vmatpush1.bf16.msra.mxu0 %v998
        %1023 = vmatprep.subr.bf16.mxu0 0
        %1024 = vmatpush1.bf16.msra.mxu0 0
        %1025 = vmatprep.subr.bf16.mxu0 0
        %1026 = vmatpush1.bf16.msra.mxu0 0
        %1027 = vmatprep.subr.bf16.mxu0 0
        %1028 = vmatpush1.bf16.msra.mxu0 0
        %1029 = vmatprep.subr.bf16.mxu0 0
        %1030 = vmatpush1.bf16.msra.mxu0 0
        %1031 = vmatprep.subr.bf16.mxu0 0
        %1032 = vmatpush1.bf16.msra.mxu0 0
        %1033 = vmatprep.subr.bf16.mxu0 0
        %1034 = vmatpush1.bf16.msra.mxu0 0
        %1035 = vmatprep.subr.bf16.mxu0 0
        %1036 = vmatpush1.bf16.msra.mxu0 0
        %1037 = vmatprep.subr.bf16.mxu0 0
        %1038 = vmatpush1.bf16.msra.mxu0 0
        %1039 = vmatprep.mubr.bf16.mxu0 0
        %1040 = vmatmul.mubr.bf16.gmra.mrb[0].mxu0 %v904
        %v1041 = vpop.f32.mrb[0].mxu0
        %v1042 = vadd.f32 %v957, %v1041
        %v1043 = vpop.f32.mrb[0].mxu0
        %v1044 = vpop.f32.mrb[0].mxu0
        %v1045 = vadd.f32 %v957, %v1044
        %v1046 = vpop.f32.mrb[0].mxu0
        %1047 = vmatprep.mubr.bf16.mxu0 0
        %1048 = vmatmul.mubr.bf16.gmra.mrb[0].mxu0 %v905
        %v1049 = vpop.f32.mrb[0].mxu0
        %v1050 = vadd.f32 %v957, %v1049
        %v1051 = vpop.f32.mrb[0].mxu0
        %v1052 = vpop.f32.mrb[0].mxu0
        %v1053 = vadd.f32 %v957, %v1052
        %v1054 = vpop.f32.mrb[0].mxu0
        %1055 = vmatprep.mubr.bf16.mxu0 0
        %1056 = vmatmul.mubr.bf16.gmra.mrb[0].mxu0 %v906
        %v1057 = vpop.f32.mrb[0].mxu0
        %v1058 = vadd.f32 %v957, %v1057
        %v1059 = vpop.f32.mrb[0].mxu0
        %v1060 = vpop.f32.mrb[0].mxu0
        %v1061 = vadd.f32 %v957, %v1060
        %v1062 = vpop.f32.mrb[0].mxu0
        %1063 = vmatprep.mubr.bf16.mxu0 0
        %1064 = vmatmul.mubr.bf16.gmra.mrb[0].mxu0 %v907
        %v1065 = vpop.f32.mrb[0].mxu0
        %v1066 = vadd.f32 %v957, %v1065
        %v1067 = vpop.f32.mrb[0].mxu0
        %v1068 = vpop.f32.mrb[0].mxu0
        %v1069 = vadd.f32 %v957, %v1068
        %v1070 = vpop.f32.mrb[0].mxu0
        %1071 = vmatprep.mubr.bf16.mxu0 0
        %1072 = vmatmul.mubr.bf16.gmra.mrb[0].mxu0 %v908
        %v1073 = vpop.f32.mrb[0].mxu0
        %v1074 = vadd.f32 %v957, %v1073
        %v1075 = vpop.f32.mrb[0].mxu0
        %v1076 = vpop.f32.mrb[0].mxu0
        %v1077 = vadd.f32 %v957, %v1076
        %v1078 = vpop.f32.mrb[0].mxu0
        %1079 = vmatprep.mubr.bf16.mxu0 0
        %1080 = vmatmul.mubr.bf16.gmra.mrb[0].mxu0 %v909
        %v1081 = vpop.f32.mrb[0].mxu0
        %v1082 = vadd.f32 %v957, %v1081
        %v1083 = vpop.f32.mrb[0].mxu0
        %v1084 = vpop.f32.mrb[0].mxu0
        %v1085 = vadd.f32 %v957, %v1084
        %v1086 = vpop.f32.mrb[0].mxu0
        %1087 = vmatprep.mubr.bf16.mxu0 0
        %1088 = vmatmul.mubr.bf16.gmra.mrb[0].mxu0 %v910
        %v1089 = vpop.f32.mrb[0].mxu0
        %v1090 = vadd.f32 %v957, %v1089
        %v1091 = vpop.f32.mrb[0].mxu0
        %v1092 = vpop.f32.mrb[0].mxu0
        %v1093 = vadd.f32 %v957, %v1092
        %v1094 = vpop.f32.mrb[0].mxu0
        %1095 = vmatprep.mubr.bf16.mxu0 0
        %1096 = vmatmul.mubr.bf16.gmra.mrb[0].mxu0 %v911
        %v1097 = vpop.f32.mrb[0].mxu0
        %v1098 = vadd.f32 %v957, %v1097
        %v1099 = vpop.f32.mrb[0].mxu0
        %v1100 = vpop.f32.mrb[0].mxu0
        %v1101 = vadd.f32 %v957, %v1100
        %v1102 = vpop.f32.mrb[0].mxu0
        %1103 = vmatprep.mubr.bf16.mxu0 0
        %1104 = vmatmul.mubr.bf16.gmra.mrb[0].mxu0 %v912
        %v1105 = vpop.f32.mrb[0].mxu0
        %v1106 = vadd.f32 %v957, %v1105
        %v1107 = vpop.f32.mrb[0].mxu0
        %v1108 = vpop.f32.mrb[0].mxu0
        %v1109 = vadd.f32 %v957, %v1108
        %v1110 = vpop.f32.mrb[0].mxu0
        %1111 = vmatprep.mubr.bf16.mxu0 0
        %1112 = vmatmul.mubr.bf16.gmra.mrb[0].mxu0 %v913
        %v1113 = vpop.f32.mrb[0].mxu0
        %v1114 = vadd.f32 %v957, %v1113
        %v1115 = vpop.f32.mrb[0].mxu0
        %v1116 = vpop.f32.mrb[0].mxu0
        %v1117 = vadd.f32 %v957, %v1116
        %v1118 = vpop.f32.mrb[0].mxu0
        %1119 = vmatprep.mubr.bf16.mxu0 0
        %1120 = vmatmul.mubr.bf16.gmra.mrb[0].mxu0 %v914
        %v1121 = vpop.f32.mrb[0].mxu0
        %v1122 = vadd.f32 %v957, %v1121
        %v1123 = vpop.f32.mrb[0].mxu0
        %v1124 = vpop.f32.mrb[0].mxu0
        %v1125 = vadd.f32 %v957, %v1124
        %v1126 = vpop.f32.mrb[0].mxu0
        %1127 = vmatprep.mubr.bf16.mxu0 0
        %1128 = vmatmul.mubr.bf16.gmra.mrb[0].mxu0 %v915
        %v1129 = vpop.f32.mrb[0].mxu0
        %v1130 = vadd.f32 %v957, %v1129
        %v1131 = vpop.f32.mrb[0].mxu0
        %v1132 = vpop.f32.mrb[0].mxu0
        %v1133 = vadd.f32 %v957, %v1132
        %v1134 = vpop.f32.mrb[0].mxu0
        %1135 = vmatprep.mubr.bf16.mxu0 0
        %1136 = vmatmul.mubr.bf16.gmra.mrb[0].mxu0 %v916
        %v1137 = vpop.f32.mrb[0].mxu0
        %v1138 = vadd.f32 %v957, %v1137
        %v1139 = vpop.f32.mrb[0].mxu0
        %v1140 = vpop.f32.mrb[0].mxu0
        %v1141 = vadd.f32 %v957, %v1140
        %v1142 = vpop.f32.mrb[0].mxu0
        %1143 = vmatprep.mubr.bf16.mxu0 0
        %1144 = vmatmul.mubr.bf16.gmra.mrb[0].mxu0 %v917
        %v1145 = vpop.f32.mrb[0].mxu0
        %v1146 = vadd.f32 %v957, %v1145
        %v1147 = vpop.f32.mrb[0].mxu0
        %v1148 = vpop.f32.mrb[0].mxu0
        %v1149 = vadd.f32 %v957, %v1148
        %v1150 = vpop.f32.mrb[0].mxu0
        %1151 = vmatprep.mubr.bf16.mxu0 0
        %1152 = vmatmul.mubr.bf16.gmra.mrb[0].mxu0 %v918
        %v1153 = vpop.f32.mrb[0].mxu0
        %v1154 = vadd.f32 %v957, %v1153
        %v1155 = vpop.f32.mrb[0].mxu0
        %v1156 = vpop.f32.mrb[0].mxu0
        %v1157 = vadd.f32 %v957, %v1156
        %v1158 = vpop.f32.mrb[0].mxu0
        %1159 = vmatprep.mubr.bf16.mxu0 0
        %1160 = vmatmul.mubr.bf16.gmra.mrb[0].mxu0 %v919
        %v1161 = vpop.f32.mrb[0].mxu0
        %v1162 = vadd.f32 %v957, %v1161
        %v1163 = vpop.f32.mrb[0].mxu0
        %v1164 = vpop.f32.mrb[0].mxu0
        %v1165 = vadd.f32 %v957, %v1164
        %v1166 = vpop.f32.mrb[0].mxu0
        %1167 = vmatprep.mubr.bf16.mxu0 0
        %1168 = vmatmul.mubr.bf16.gmra.mrb[0].mxu0 %v920
        %v1169 = vpop.f32.mrb[0].mxu0
        %v1170 = vadd.f32 %v957, %v1169
        %v1171 = vpop.f32.mrb[0].mxu0
        %v1172 = vpop.f32.mrb[0].mxu0
        %v1173 = vadd.f32 %v957, %v1172
        %v1174 = vpop.f32.mrb[0].mxu0
        %1175 = vmatprep.mubr.bf16.mxu0 0
        %1176 = vmatmul.mubr.bf16.gmra.mrb[0].mxu0 %v921
        %v1177 = vpop.f32.mrb[0].mxu0
        %v1178 = vadd.f32 %v957, %v1177
        %v1179 = vpop.f32.mrb[0].mxu0
        %v1180 = vpop.f32.mrb[0].mxu0
        %v1181 = vadd.f32 %v957, %v1180
        %v1182 = vpop.f32.mrb[0].mxu0
        %1183 = vmatprep.mubr.bf16.mxu0 0
        %1184 = vmatmul.mubr.bf16.gmra.mrb[0].mxu0 %v922
        %v1185 = vpop.f32.mrb[0].mxu0
        %v1186 = vadd.f32 %v957, %v1185
        %v1187 = vpop.f32.mrb[0].mxu0
        %v1188 = vpop.f32.mrb[0].mxu0
        %v1189 = vadd.f32 %v957, %v1188
        %v1190 = vpop.f32.mrb[0].mxu0
        %1191 = vmatprep.mubr.bf16.mxu0 0
        %1192 = vmatmul.mubr.bf16.gmra.mrb[0].mxu0 %v923
        %v1193 = vpop.f32.mrb[0].mxu0
        %v1194 = vadd.f32 %v957, %v1193
        %v1195 = vpop.f32.mrb[0].mxu0
        %v1196 = vpop.f32.mrb[0].mxu0
        %v1197 = vadd.f32 %v957, %v1196
        %v1198 = vpop.f32.mrb[0].mxu0
        %1199 = vmatprep.mubr.bf16.mxu0 0
        %1200 = vmatmul.mubr.bf16.gmra.mrb[0].mxu0 %v924
        %v1201 = vpop.f32.mrb[0].mxu0
        %v1202 = vadd.f32 %v957, %v1201
        %v1203 = vpop.f32.mrb[0].mxu0
        %v1204 = vpop.f32.mrb[0].mxu0
        %v1205 = vadd.f32 %v957, %v1204
        %v1206 = vpop.f32.mrb[0].mxu0
        %1207 = vmatprep.mubr.bf16.mxu0 0
        %1208 = vmatmul.mubr.bf16.gmra.mrb[0].mxu0 %v925
        %v1209 = vpop.f32.mrb[0].mxu0
        %v1210 = vadd.f32 %v957, %v1209
        %v1211 = vpop.f32.mrb[0].mxu0
        %v1212 = vpop.f32.mrb[0].mxu0
        %v1213 = vadd.f32 %v957, %v1212
        %v1214 = vpop.f32.mrb[0].mxu0
        %1215 = vmatprep.mubr.bf16.mxu0 0
        %1216 = vmatmul.mubr.bf16.gmra.mrb[0].mxu0 %v926
        %v1217 = vpop.f32.mrb[0].mxu0
        %v1218 = vadd.f32 %v957, %v1217
        %v1219 = vpop.f32.mrb[0].mxu0
        %v1220 = vpop.f32.mrb[0].mxu0
        %v1221 = vadd.f32 %v957, %v1220
        %v1222 = vpop.f32.mrb[0].mxu0
        %1223 = vmatprep.mubr.bf16.mxu0 0
        %1224 = vmatmul.mubr.bf16.gmra.mrb[0].mxu0 %v927
        %v1225 = vpop.f32.mrb[0].mxu0
        %v1226 = vadd.f32 %v957, %v1225
        %v1227 = vpop.f32.mrb[0].mxu0
        %v1228 = vpop.f32.mrb[0].mxu0
        %v1229 = vadd.f32 %v957, %v1228
        %v1230 = vpop.f32.mrb[0].mxu0
        %1231 = vmatprep.mubr.bf16.mxu0 0
        %1232 = vmatmul.mubr.bf16.gmra.mrb[0].mxu0 %v928
        %v1233 = vpop.f32.mrb[0].mxu0
        %v1234 = vadd.f32 %v957, %v1233
        %v1235 = vpop.f32.mrb[0].mxu0
        %v1236 = vpop.f32.mrb[0].mxu0
        %v1237 = vadd.f32 %v957, %v1236
        %v1238 = vpop.f32.mrb[0].mxu0
        %1239 = vmatprep.mubr.bf16.mxu0 0
        %1240 = vmatmul.mubr.bf16.gmra.mrb[0].mxu0 %v929
        %v1241 = vpop.f32.mrb[0].mxu0
        %v1242 = vadd.f32 %v957, %v1241
        %v1243 = vpop.f32.mrb[0].mxu0
        %v1244 = vpop.f32.mrb[0].mxu0
        %v1245 = vadd.f32 %v957, %v1244
        %v1246 = vpop.f32.mrb[0].mxu0
        %1247 = vmatprep.mubr.bf16.mxu0 0
        %1248 = vmatmul.mubr.bf16.gmra.mrb[0].mxu0 %v930
        %v1249 = vpop.f32.mrb[0].mxu0
        %v1250 = vadd.f32 %v957, %v1249
        %v1251 = vpop.f32.mrb[0].mxu0
        %v1252 = vpop.f32.mrb[0].mxu0
        %v1253 = vadd.f32 %v957, %v1252
        %v1254 = vpop.f32.mrb[0].mxu0
        %1255 = vmatprep.mubr.bf16.mxu0 0
        %1256 = vmatmul.mubr.bf16.gmra.mrb[0].mxu0 %v931
        %v1257 = vpop.f32.mrb[0].mxu0
        %v1258 = vadd.f32 %v957, %v1257
        %v1259 = vpop.f32.mrb[0].mxu0
        %v1260 = vpop.f32.mrb[0].mxu0
        %v1261 = vadd.f32 %v957, %v1260
        %v1262 = vpop.f32.mrb[0].mxu0
        %1263 = vmatprep.mubr.bf16.mxu0 0
        %1264 = vmatmul.mubr.bf16.gmra.mrb[0].mxu0 %v932
        %v1265 = vpop.f32.mrb[0].mxu0
        %v1266 = vadd.f32 %v957, %v1265
        %v1267 = vpop.f32.mrb[0].mxu0
        %v1268 = vpop.f32.mrb[0].mxu0
        %v1269 = vadd.f32 %v957, %v1268
        %v1270 = vpop.f32.mrb[0].mxu0
        %1271 = vmatprep.mubr.bf16.mxu0 0
        %1272 = vmatmul.mubr.bf16.gmra.mrb[0].mxu0 %v933
        %v1273 = vpop.f32.mrb[0].mxu0
        %v1274 = vadd.f32 %v957, %v1273
        %v1275 = vpop.f32.mrb[0].mxu0
        %v1276 = vpop.f32.mrb[0].mxu0
        %v1277 = vadd.f32 %v957, %v1276
        %v1278 = vpop.f32.mrb[0].mxu0
        %1279 = vmatprep.mubr.bf16.mxu0 0
        %1280 = vmatmul.mubr.bf16.gmra.mrb[0].mxu0 %v934
        %v1281 = vpop.f32.mrb[0].mxu0
        %v1282 = vadd.f32 %v957, %v1281
        %v1283 = vpop.f32.mrb[0].mxu0
        %v1284 = vpop.f32.mrb[0].mxu0
        %v1285 = vadd.f32 %v957, %v1284
        %v1286 = vpop.f32.mrb[0].mxu0
        %1287 = vmatprep.mubr.bf16.mxu0 0
        %1288 = vmatmul.mubr.bf16.gmra.mrb[0].mxu0 %v935
        %v1289 = vpop.f32.mrb[0].mxu0
        %v1290 = vadd.f32 %v957, %v1289
        %v1291 = vpop.f32.mrb[0].mxu0
        %v1292 = vpop.f32.mrb[0].mxu0
        %v1293 = vadd.f32 %v957, %v1292
        %v1294 = vpop.f32.mrb[0].mxu0
        %1295 = vdwg.mxu0
        %v1296 = vmax.f32 %v1042, 0.0
        %v1297 = vmax.f32 %v1045, 0.0
        %v1298 = vmax.f32 %v1050, 0.0
        %v1299 = vmax.f32 %v1053, 0.0
        %v1300 = vmax.f32 %v1058, 0.0
        %v1301 = vmax.f32 %v1061, 0.0
        %v1302 = vmax.f32 %v1066, 0.0
        %v1303 = vmax.f32 %v1069, 0.0
        %v1304 = vmax.f32 %v1074, 0.0
        %v1305 = vmax.f32 %v1077, 0.0
        %v1306 = vmax.f32 %v1082, 0.0
        %v1307 = vmax.f32 %v1085, 0.0
        %v1308 = vmax.f32 %v1090, 0.0
        %v1309 = vmax.f32 %v1093, 0.0
        %v1310 = vmax.f32 %v1098, 0.0
        %v1311 = vmax.f32 %v1101, 0.0
        %v1312 = vmax.f32 %v1106, 0.0
        %v1313 = vmax.f32 %v1109, 0.0
        %v1314 = vmax.f32 %v1114, 0.0
        %v1315 = vmax.f32 %v1117, 0.0
        %v1316 = vmax.f32 %v1122, 0.0
        %v1317 = vmax.f32 %v1125, 0.0
        %v1318 = vmax.f32 %v1130, 0.0
        %v1319 = vmax.f32 %v1133, 0.0
        %v1320 = vmax.f32 %v1138, 0.0
        %v1321 = vmax.f32 %v1141, 0.0
        %v1322 = vmax.f32 %v1146, 0.0
        %v1323 = vmax.f32 %v1149, 0.0
        %v1324 = vmax.f32 %v1154, 0.0
        %v1325 = vmax.f32 %v1157, 0.0
        %v1326 = vmax.f32 %v1162, 0.0
        %v1327 = vmax.f32 %v1165, 0.0
        %v1328 = vmax.f32 %v1170, 0.0
        %v1329 = vmax.f32 %v1173, 0.0
        %v1330 = vmax.f32 %v1178, 0.0
        %v1331 = vmax.f32 %v1181, 0.0
        %v1332 = vmax.f32 %v1186, 0.0
        %v1333 = vmax.f32 %v1189, 0.0
        %v1334 = vmax.f32 %v1194, 0.0
        %v1335 = vmax.f32 %v1197, 0.0
        %v1336 = vmax.f32 %v1202, 0.0
        %v1337 = vmax.f32 %v1205, 0.0
        %v1338 = vmax.f32 %v1210, 0.0
        %v1339 = vmax.f32 %v1213, 0.0
        %v1340 = vmax.f32 %v1218, 0.0
        %v1341 = vmax.f32 %v1221, 0.0
        %v1342 = vmax.f32 %v1226, 0.0
        %v1343 = vmax.f32 %v1229, 0.0
        %v1344 = vmax.f32 %v1234, 0.0
        %v1345 = vmax.f32 %v1237, 0.0
        %v1346 = vmax.f32 %v1242, 0.0
        %v1347 = vmax.f32 %v1245, 0.0
        %v1348 = vmax.f32 %v1250, 0.0
        %v1349 = vmax.f32 %v1253, 0.0
        %v1350 = vmax.f32 %v1258, 0.0
        %v1351 = vmax.f32 %v1261, 0.0
        %v1352 = vmax.f32 %v1266, 0.0
        %v1353 = vmax.f32 %v1269, 0.0
        %v1354 = vmax.f32 %v1274, 0.0
        %v1355 = vmax.f32 %v1277, 0.0
        %v1356 = vmax.f32 %v1282, 0.0
        %v1357 = vmax.f32 %v1285, 0.0
        %v1358 = vmax.f32 %v1290, 0.0
        %v1359 = vmax.f32 %v1293, 0.0
        %v1360 = vpack.c.bf16 %v1297, %v1296
        %v1361 = vpack.c.bf16 %v1299, %v1298
        %v1362 = vpack.c.bf16 %v1301, %v1300
        %v1363 = vpack.c.bf16 %v1303, %v1302
        %v1364 = vpack.c.bf16 %v1305, %v1304
        %v1365 = vpack.c.bf16 %v1307, %v1306
        %v1366 = vpack.c.bf16 %v1309, %v1308
        %v1367 = vpack.c.bf16 %v1311, %v1310
        %v1368 = vpack.c.bf16 %v1313, %v1312
        %v1369 = vpack.c.bf16 %v1315, %v1314
        %v1370 = vpack.c.bf16 %v1317, %v1316
        %v1371 = vpack.c.bf16 %v1319, %v1318
        %v1372 = vpack.c.bf16 %v1321, %v1320
        %v1373 = vpack.c.bf16 %v1323, %v1322
        %v1374 = vpack.c.bf16 %v1325, %v1324
        %v1375 = vpack.c.bf16 %v1327, %v1326
        %v1376 = vpack.c.bf16 %v1329, %v1328
        %v1377 = vpack.c.bf16 %v1331, %v1330
        %v1378 = vpack.c.bf16 %v1333, %v1332
        %v1379 = vpack.c.bf16 %v1335, %v1334
        %v1380 = vpack.c.bf16 %v1337, %v1336
        %v1381 = vpack.c.bf16 %v1339, %v1338
        %v1382 = vpack.c.bf16 %v1341, %v1340
        %v1383 = vpack.c.bf16 %v1343, %v1342
        %v1384 = vpack.c.bf16 %v1345, %v1344
        %v1385 = vpack.c.bf16 %v1347, %v1346
        %v1386 = vpack.c.bf16 %v1349, %v1348
        %v1387 = vpack.c.bf16 %v1351, %v1350
        %v1388 = vpack.c.bf16 %v1353, %v1352
        %v1389 = vpack.c.bf16 %v1355, %v1354
        %v1390 = vpack.c.bf16 %v1357, %v1356
        %v1391 = vpack.c.bf16 %v1359, %v1358
        %v1392 = vld [vmem:[%s5] sm:$0xf]
        %v1393 = vld [vmem:[%s5 + $0x4] sm:$0xf]
        %v1394 = vld [vmem:[%s5 + $0x8] sm:$0xf]
        %v1395 = vld [vmem:[%s5 + $0xc] sm:$0xf]
        %v1396 = vld [vmem:[%s5 + $0x10] sm:$0xf]
        %v1397 = vld [vmem:[%s5 + $0x14] sm:$0xf]
        %v1398 = vld [vmem:[%s5 + $0x18] sm:$0xf]
        %v1399 = vld [vmem:[%s5 + $0x1c] sm:$0xf]
        %v1400 = vld [vmem:[%s5 + $0x20] sm:$0xf]
        %v1401 = vld [vmem:[%s5 + $0x24] sm:$0xf]
        %v1402 = vld [vmem:[%s5 + $0x28] sm:$0xf]
        %v1403 = vld [vmem:[%s5 + $0x2c] sm:$0xf]
        %v1404 = vld [vmem:[%s5 + $0x30] sm:$0xf]
        %v1405 = vld [vmem:[%s5 + $0x34] sm:$0xf]
        %v1406 = vld [vmem:[%s5 + $0x38] sm:$0xf]
        %v1407 = vld [vmem:[%s5 + $0x3c] sm:$0xf]
        %v1408 = vld [vmem:[%s6] sm:$0x1]
        %v1410 = vlaneseq
        %v1411 = vshrl.u32 %v1410, 7
        %v1412 = vsub.s32 0, %v1411
        %v1413 = vrot.slane %v1408, %v1412
        %v1431 = vunpack.c.l.b16 %v1392
        %v1432 = vunpack.c.l.b16 %v1393
        %v1433 = vunpack.c.l.b16 %v1394
        %v1434 = vunpack.c.l.b16 %v1395
        %v1435 = vunpack.c.l.b16 %v1396
        %v1436 = vunpack.c.l.b16 %v1397
        %v1437 = vunpack.c.l.b16 %v1398
        %v1438 = vunpack.c.l.b16 %v1399
        %v1439 = vunpack.c.l.b16 %v1400
        %v1440 = vunpack.c.l.b16 %v1401
        %v1441 = vunpack.c.l.b16 %v1402
        %v1442 = vunpack.c.l.b16 %v1403
        %v1443 = vunpack.c.l.b16 %v1404
        %v1444 = vunpack.c.l.b16 %v1405
        %v1445 = vunpack.c.l.b16 %v1406
        %v1446 = vunpack.c.l.b16 %v1407
        %v1447 = vpack.c.b16 %v1432, %v1431
        %v1448 = vpack.c.b16 %v1434, %v1433
        %v1449 = vpack.c.b16 %v1436, %v1435
        %v1450 = vpack.c.b16 %v1438, %v1437
        %v1451 = vpack.c.b16 %v1440, %v1439
        %v1452 = vpack.c.b16 %v1442, %v1441
        %v1453 = vpack.c.b16 %v1444, %v1443
        %v1454 = vpack.c.b16 %v1446, %v1445
        %1463 = vmatprep.subr.bf16.mxu0 0
        %1464 = vmatpush1.bf16.msra.mxu0 %v1447
        %1465 = vmatprep.subr.bf16.mxu0 0
        %1466 = vmatpush1.bf16.msra.mxu0 %v1448
        %1467 = vmatprep.subr.bf16.mxu0 0
        %1468 = vmatpush1.bf16.msra.mxu0 %v1449
        %1469 = vmatprep.subr.bf16.mxu0 0
        %1470 = vmatpush1.bf16.msra.mxu0 %v1450
        %1471 = vmatprep.subr.bf16.mxu0 0
        %1472 = vmatpush1.bf16.msra.mxu0 %v1451
        %1473 = vmatprep.subr.bf16.mxu0 0
        %1474 = vmatpush1.bf16.msra.mxu0 %v1452
        %1475 = vmatprep.subr.bf16.mxu0 0
        %1476 = vmatpush1.bf16.msra.mxu0 %v1453
        %1477 = vmatprep.subr.bf16.mxu0 0
        %1478 = vmatpush1.bf16.msra.mxu0 %v1454
        %1479 = vmatprep.subr.bf16.mxu0 0
        %1480 = vmatpush1.bf16.msra.mxu0 0
        %1481 = vmatprep.subr.bf16.mxu0 0
        %1482 = vmatpush1.bf16.msra.mxu0 0
        %1483 = vmatprep.subr.bf16.mxu0 0
        %1484 = vmatpush1.bf16.msra.mxu0 0
        %1485 = vmatprep.subr.bf16.mxu0 0
        %1486 = vmatpush1.bf16.msra.mxu0 0
        %1487 = vmatprep.subr.bf16.mxu0 0
        %1488 = vmatpush1.bf16.msra.mxu0 0
        %1489 = vmatprep.subr.bf16.mxu0 0
        %1490 = vmatpush1.bf16.msra.mxu0 0
        %1491 = vmatprep.subr.bf16.mxu0 0
        %1492 = vmatpush1.bf16.msra.mxu0 0
        %1493 = vmatprep.subr.bf16.mxu0 0
        %1494 = vmatpush1.bf16.msra.mxu0 0
        %1495 = vmatprep.mubr.bf16.mxu0 0
        %1496 = vmatmul.mubr.bf16.gmra.mrb[0].mxu0 %v1360
        %v1497 = vpop.f32.mrb[0].mxu0
        %v1498 = vadd.f32 %v1413, %v1497
        %v1499 = vpop.f32.mrb[0].mxu0
        %v1500 = vpop.f32.mrb[0].mxu0
        %v1501 = vadd.f32 %v1413, %v1500
        %v1502 = vpop.f32.mrb[0].mxu0
        %1503 = vmatprep.mubr.bf16.mxu0 0
        %1504 = vmatmul.mubr.bf16.gmra.mrb[0].mxu0 %v1361
        %v1505 = vpop.f32.mrb[0].mxu0
        %v1506 = vadd.f32 %v1413, %v1505
        %v1507 = vpop.f32.mrb[0].mxu0
        %v1508 = vpop.f32.mrb[0].mxu0
        %v1509 = vadd.f32 %v1413, %v1508
        %v1510 = vpop.f32.mrb[0].mxu0
        %1511 = vmatprep.mubr.bf16.mxu0 0
        %1512 = vmatmul.mubr.bf16.gmra.mrb[0].mxu0 %v1362
        %v1513 = vpop.f32.mrb[0].mxu0
        %v1514 = vadd.f32 %v1413, %v1513
        %v1515 = vpop.f32.mrb[0].mxu0
        %v1516 = vpop.f32.mrb[0].mxu0
        %v1517 = vadd.f32 %v1413, %v1516
        %v1518 = vpop.f32.mrb[0].mxu0
        %1519 = vmatprep.mubr.bf16.mxu0 0
        %1520 = vmatmul.mubr.bf16.gmra.mrb[0].mxu0 %v1363
        %v1521 = vpop.f32.mrb[0].mxu0
        %v1522 = vadd.f32 %v1413, %v1521
        %v1523 = vpop.f32.mrb[0].mxu0
        %v1524 = vpop.f32.mrb[0].mxu0
        %v1525 = vadd.f32 %v1413, %v1524
        %v1526 = vpop.f32.mrb[0].mxu0
        %1527 = vmatprep.mubr.bf16.mxu0 0
        %1528 = vmatmul.mubr.bf16.gmra.mrb[0].mxu0 %v1364
        %v1529 = vpop.f32.mrb[0].mxu0
        %v1530 = vadd.f32 %v1413, %v1529
        %v1531 = vpop.f32.mrb[0].mxu0
        %v1532 = vpop.f32.mrb[0].mxu0
        %v1533 = vadd.f32 %v1413, %v1532
        %v1534 = vpop.f32.mrb[0].mxu0
        %1535 = vmatprep.mubr.bf16.mxu0 0
        %1536 = vmatmul.mubr.bf16.gmra.mrb[0].mxu0 %v1365
        %v1537 = vpop.f32.mrb[0].mxu0
        %v1538 = vadd.f32 %v1413, %v1537
        %v1539 = vpop.f32.mrb[0].mxu0
        %v1540 = vpop.f32.mrb[0].mxu0
        %v1541 = vadd.f32 %v1413, %v1540
        %v1542 = vpop.f32.mrb[0].mxu0
        %1543 = vmatprep.mubr.bf16.mxu0 0
        %1544 = vmatmul.mubr.bf16.gmra.mrb[0].mxu0 %v1366
        %v1545 = vpop.f32.mrb[0].mxu0
        %v1546 = vadd.f32 %v1413, %v1545
        %v1547 = vpop.f32.mrb[0].mxu0
        %v1548 = vpop.f32.mrb[0].mxu0
        %v1549 = vadd.f32 %v1413, %v1548
        %v1550 = vpop.f32.mrb[0].mxu0
        %1551 = vmatprep.mubr.bf16.mxu0 0
        %1552 = vmatmul.mubr.bf16.gmra.mrb[0].mxu0 %v1367
        %v1553 = vpop.f32.mrb[0].mxu0
        %v1554 = vadd.f32 %v1413, %v1553
        %v1555 = vpop.f32.mrb[0].mxu0
        %v1556 = vpop.f32.mrb[0].mxu0
        %v1557 = vadd.f32 %v1413, %v1556
        %v1558 = vpop.f32.mrb[0].mxu0
        %1559 = vmatprep.mubr.bf16.mxu0 0
        %1560 = vmatmul.mubr.bf16.gmra.mrb[0].mxu0 %v1368
        %v1561 = vpop.f32.mrb[0].mxu0
        %v1562 = vadd.f32 %v1413, %v1561
        %v1563 = vpop.f32.mrb[0].mxu0
        %v1564 = vpop.f32.mrb[0].mxu0
        %v1565 = vadd.f32 %v1413, %v1564
        %v1566 = vpop.f32.mrb[0].mxu0
        %1567 = vmatprep.mubr.bf16.mxu0 0
        %1568 = vmatmul.mubr.bf16.gmra.mrb[0].mxu0 %v1369
        %v1569 = vpop.f32.mrb[0].mxu0
        %v1570 = vadd.f32 %v1413, %v1569
        %v1571 = vpop.f32.mrb[0].mxu0
        %v1572 = vpop.f32.mrb[0].mxu0
        %v1573 = vadd.f32 %v1413, %v1572
        %v1574 = vpop.f32.mrb[0].mxu0
        %1575 = vmatprep.mubr.bf16.mxu0 0
        %1576 = vmatmul.mubr.bf16.gmra.mrb[0].mxu0 %v1370
        %v1577 = vpop.f32.mrb[0].mxu0
        %v1578 = vadd.f32 %v1413, %v1577
        %v1579 = vpop.f32.mrb[0].mxu0
        %v1580 = vpop.f32.mrb[0].mxu0
        %v1581 = vadd.f32 %v1413, %v1580
        %v1582 = vpop.f32.mrb[0].mxu0
        %1583 = vmatprep.mubr.bf16.mxu0 0
        %1584 = vmatmul.mubr.bf16.gmra.mrb[0].mxu0 %v1371
        %v1585 = vpop.f32.mrb[0].mxu0
        %v1586 = vadd.f32 %v1413, %v1585
        %v1587 = vpop.f32.mrb[0].mxu0
        %v1588 = vpop.f32.mrb[0].mxu0
        %v1589 = vadd.f32 %v1413, %v1588
        %v1590 = vpop.f32.mrb[0].mxu0
        %1591 = vmatprep.mubr.bf16.mxu0 0
        %1592 = vmatmul.mubr.bf16.gmra.mrb[0].mxu0 %v1372
        %v1593 = vpop.f32.mrb[0].mxu0
        %v1594 = vadd.f32 %v1413, %v1593
        %v1595 = vpop.f32.mrb[0].mxu0
        %v1596 = vpop.f32.mrb[0].mxu0
        %v1597 = vadd.f32 %v1413, %v1596
        %v1598 = vpop.f32.mrb[0].mxu0
        %1599 = vmatprep.mubr.bf16.mxu0 0
        %1600 = vmatmul.mubr.bf16.gmra.mrb[0].mxu0 %v1373
        %v1601 = vpop.f32.mrb[0].mxu0
        %v1602 = vadd.f32 %v1413, %v1601
        %v1603 = vpop.f32.mrb[0].mxu0
        %v1604 = vpop.f32.mrb[0].mxu0
        %v1605 = vadd.f32 %v1413, %v1604
        %v1606 = vpop.f32.mrb[0].mxu0
        %1607 = vmatprep.mubr.bf16.mxu0 0
        %1608 = vmatmul.mubr.bf16.gmra.mrb[0].mxu0 %v1374
        %v1609 = vpop.f32.mrb[0].mxu0
        %v1610 = vadd.f32 %v1413, %v1609
        %v1611 = vpop.f32.mrb[0].mxu0
        %v1612 = vpop.f32.mrb[0].mxu0
        %v1613 = vadd.f32 %v1413, %v1612
        %v1614 = vpop.f32.mrb[0].mxu0
        %1615 = vmatprep.mubr.bf16.mxu0 0
        %1616 = vmatmul.mubr.bf16.gmra.mrb[0].mxu0 %v1375
        %v1617 = vpop.f32.mrb[0].mxu0
        %v1618 = vadd.f32 %v1413, %v1617
        %v1619 = vpop.f32.mrb[0].mxu0
        %v1620 = vpop.f32.mrb[0].mxu0
        %v1621 = vadd.f32 %v1413, %v1620
        %v1622 = vpop.f32.mrb[0].mxu0
        %1623 = vmatprep.mubr.bf16.mxu0 0
        %1624 = vmatmul.mubr.bf16.gmra.mrb[0].mxu0 %v1376
        %v1625 = vpop.f32.mrb[0].mxu0
        %v1626 = vadd.f32 %v1413, %v1625
        %v1627 = vpop.f32.mrb[0].mxu0
        %v1628 = vpop.f32.mrb[0].mxu0
        %v1629 = vadd.f32 %v1413, %v1628
        %v1630 = vpop.f32.mrb[0].mxu0
        %1631 = vmatprep.mubr.bf16.mxu0 0
        %1632 = vmatmul.mubr.bf16.gmra.mrb[0].mxu0 %v1377
        %v1633 = vpop.f32.mrb[0].mxu0
        %v1634 = vadd.f32 %v1413, %v1633
        %v1635 = vpop.f32.mrb[0].mxu0
        %v1636 = vpop.f32.mrb[0].mxu0
        %v1637 = vadd.f32 %v1413, %v1636
        %v1638 = vpop.f32.mrb[0].mxu0
        %1639 = vmatprep.mubr.bf16.mxu0 0
        %1640 = vmatmul.mubr.bf16.gmra.mrb[0].mxu0 %v1378
        %v1641 = vpop.f32.mrb[0].mxu0
        %v1642 = vadd.f32 %v1413, %v1641
        %v1643 = vpop.f32.mrb[0].mxu0
        %v1644 = vpop.f32.mrb[0].mxu0
        %v1645 = vadd.f32 %v1413, %v1644
        %v1646 = vpop.f32.mrb[0].mxu0
        %1647 = vmatprep.mubr.bf16.mxu0 0
        %1648 = vmatmul.mubr.bf16.gmra.mrb[0].mxu0 %v1379
        %v1649 = vpop.f32.mrb[0].mxu0
        %v1650 = vadd.f32 %v1413, %v1649
        %v1651 = vpop.f32.mrb[0].mxu0
        %v1652 = vpop.f32.mrb[0].mxu0
        %v1653 = vadd.f32 %v1413, %v1652
        %v1654 = vpop.f32.mrb[0].mxu0
        %1655 = vmatprep.mubr.bf16.mxu0 0
        %1656 = vmatmul.mubr.bf16.gmra.mrb[0].mxu0 %v1380
        %v1657 = vpop.f32.mrb[0].mxu0
        %v1658 = vadd.f32 %v1413, %v1657
        %v1659 = vpop.f32.mrb[0].mxu0
        %v1660 = vpop.f32.mrb[0].mxu0
        %v1661 = vadd.f32 %v1413, %v1660
        %v1662 = vpop.f32.mrb[0].mxu0
        %1663 = vmatprep.mubr.bf16.mxu0 0
        %1664 = vmatmul.mubr.bf16.gmra.mrb[0].mxu0 %v1381
        %v1665 = vpop.f32.mrb[0].mxu0
        %v1666 = vadd.f32 %v1413, %v1665
        %v1667 = vpop.f32.mrb[0].mxu0
        %v1668 = vpop.f32.mrb[0].mxu0
        %v1669 = vadd.f32 %v1413, %v1668
        %v1670 = vpop.f32.mrb[0].mxu0
        %1671 = vmatprep.mubr.bf16.mxu0 0
        %1672 = vmatmul.mubr.bf16.gmra.mrb[0].mxu0 %v1382
        %v1673 = vpop.f32.mrb[0].mxu0
        %v1674 = vadd.f32 %v1413, %v1673
        %v1675 = vpop.f32.mrb[0].mxu0
        %v1676 = vpop.f32.mrb[0].mxu0
        %v1677 = vadd.f32 %v1413, %v1676
        %v1678 = vpop.f32.mrb[0].mxu0
        %1679 = vmatprep.mubr.bf16.mxu0 0
        %1680 = vmatmul.mubr.bf16.gmra.mrb[0].mxu0 %v1383
        %v1681 = vpop.f32.mrb[0].mxu0
        %v1682 = vadd.f32 %v1413, %v1681
        %v1683 = vpop.f32.mrb[0].mxu0
        %v1684 = vpop.f32.mrb[0].mxu0
        %v1685 = vadd.f32 %v1413, %v1684
        %v1686 = vpop.f32.mrb[0].mxu0
        %1687 = vmatprep.mubr.bf16.mxu0 0
        %1688 = vmatmul.mubr.bf16.gmra.mrb[0].mxu0 %v1384
        %v1689 = vpop.f32.mrb[0].mxu0
        %v1690 = vadd.f32 %v1413, %v1689
        %v1691 = vpop.f32.mrb[0].mxu0
        %v1692 = vpop.f32.mrb[0].mxu0
        %v1693 = vadd.f32 %v1413, %v1692
        %v1694 = vpop.f32.mrb[0].mxu0
        %1695 = vmatprep.mubr.bf16.mxu0 0
        %1696 = vmatmul.mubr.bf16.gmra.mrb[0].mxu0 %v1385
        %v1697 = vpop.f32.mrb[0].mxu0
        %v1698 = vadd.f32 %v1413, %v1697
        %v1699 = vpop.f32.mrb[0].mxu0
        %v1700 = vpop.f32.mrb[0].mxu0
        %v1701 = vadd.f32 %v1413, %v1700
        %v1702 = vpop.f32.mrb[0].mxu0
        %1703 = vmatprep.mubr.bf16.mxu0 0
        %1704 = vmatmul.mubr.bf16.gmra.mrb[0].mxu0 %v1386
        %v1705 = vpop.f32.mrb[0].mxu0
        %v1706 = vadd.f32 %v1413, %v1705
        %v1707 = vpop.f32.mrb[0].mxu0
        %v1708 = vpop.f32.mrb[0].mxu0
        %v1709 = vadd.f32 %v1413, %v1708
        %v1710 = vpop.f32.mrb[0].mxu0
        %1711 = vmatprep.mubr.bf16.mxu0 0
        %1712 = vmatmul.mubr.bf16.gmra.mrb[0].mxu0 %v1387
        %v1713 = vpop.f32.mrb[0].mxu0
        %v1714 = vadd.f32 %v1413, %v1713
        %v1715 = vpop.f32.mrb[0].mxu0
        %v1716 = vpop.f32.mrb[0].mxu0
        %v1717 = vadd.f32 %v1413, %v1716
        %v1718 = vpop.f32.mrb[0].mxu0
        %1719 = vmatprep.mubr.bf16.mxu0 0
        %1720 = vmatmul.mubr.bf16.gmra.mrb[0].mxu0 %v1388
        %v1721 = vpop.f32.mrb[0].mxu0
        %v1722 = vadd.f32 %v1413, %v1721
        %v1723 = vpop.f32.mrb[0].mxu0
        %v1724 = vpop.f32.mrb[0].mxu0
        %v1725 = vadd.f32 %v1413, %v1724
        %v1726 = vpop.f32.mrb[0].mxu0
        %1727 = vmatprep.mubr.bf16.mxu0 0
        %1728 = vmatmul.mubr.bf16.gmra.mrb[0].mxu0 %v1389
        %v1729 = vpop.f32.mrb[0].mxu0
        %v1730 = vadd.f32 %v1413, %v1729
        %v1731 = vpop.f32.mrb[0].mxu0
        %v1732 = vpop.f32.mrb[0].mxu0
        %v1733 = vadd.f32 %v1413, %v1732
        %v1734 = vpop.f32.mrb[0].mxu0
        %1735 = vmatprep.mubr.bf16.mxu0 0
        %1736 = vmatmul.mubr.bf16.gmra.mrb[0].mxu0 %v1390
        %v1737 = vpop.f32.mrb[0].mxu0
        %v1738 = vadd.f32 %v1413, %v1737
        %v1739 = vpop.f32.mrb[0].mxu0
        %v1740 = vpop.f32.mrb[0].mxu0
        %v1741 = vadd.f32 %v1413, %v1740
        %v1742 = vpop.f32.mrb[0].mxu0
        %1743 = vmatprep.mubr.bf16.mxu0 0
        %1744 = vmatmul.mubr.bf16.gmra.mrb[0].mxu0 %v1391
        %v1745 = vpop.f32.mrb[0].mxu0
        %v1746 = vadd.f32 %v1413, %v1745
        %v1747 = vpop.f32.mrb[0].mxu0
        %v1748 = vpop.f32.mrb[0].mxu0
        %v1749 = vadd.f32 %v1413, %v1748
        %v1750 = vpop.f32.mrb[0].mxu0
        %1751 = vdwg.mxu0
        %v1752 = vmax.f32 %v1498, 0.0
        %v1753 = vmax.f32 %v1501, 0.0
        %v1754 = vmax.f32 %v1506, 0.0
        %v1755 = vmax.f32 %v1509, 0.0
        %v1756 = vmax.f32 %v1514, 0.0
        %v1757 = vmax.f32 %v1517, 0.0
        %v1758 = vmax.f32 %v1522, 0.0
        %v1759 = vmax.f32 %v1525, 0.0
        %v1760 = vmax.f32 %v1530, 0.0
        %v1761 = vmax.f32 %v1533, 0.0
        %v1762 = vmax.f32 %v1538, 0.0
        %v1763 = vmax.f32 %v1541, 0.0
        %v1764 = vmax.f32 %v1546, 0.0
        %v1765 = vmax.f32 %v1549, 0.0
        %v1766 = vmax.f32 %v1554, 0.0
        %v1767 = vmax.f32 %v1557, 0.0
        %v1768 = vmax.f32 %v1562, 0.0
        %v1769 = vmax.f32 %v1565, 0.0
        %v1770 = vmax.f32 %v1570, 0.0
        %v1771 = vmax.f32 %v1573, 0.0
        %v1772 = vmax.f32 %v1578, 0.0
        %v1773 = vmax.f32 %v1581, 0.0
        %v1774 = vmax.f32 %v1586, 0.0
        %v1775 = vmax.f32 %v1589, 0.0
        %v1776 = vmax.f32 %v1594, 0.0
        %v1777 = vmax.f32 %v1597, 0.0
        %v1778 = vmax.f32 %v1602, 0.0
        %v1779 = vmax.f32 %v1605, 0.0
        %v1780 = vmax.f32 %v1610, 0.0
        %v1781 = vmax.f32 %v1613, 0.0
        %v1782 = vmax.f32 %v1618, 0.0
        %v1783 = vmax.f32 %v1621, 0.0
        %v1784 = vmax.f32 %v1626, 0.0
        %v1785 = vmax.f32 %v1629, 0.0
        %v1786 = vmax.f32 %v1634, 0.0
        %v1787 = vmax.f32 %v1637, 0.0
        %v1788 = vmax.f32 %v1642, 0.0
        %v1789 = vmax.f32 %v1645, 0.0
        %v1790 = vmax.f32 %v1650, 0.0
        %v1791 = vmax.f32 %v1653, 0.0
        %v1792 = vmax.f32 %v1658, 0.0
        %v1793 = vmax.f32 %v1661, 0.0
        %v1794 = vmax.f32 %v1666, 0.0
        %v1795 = vmax.f32 %v1669, 0.0
        %v1796 = vmax.f32 %v1674, 0.0
        %v1797 = vmax.f32 %v1677, 0.0
        %v1798 = vmax.f32 %v1682, 0.0
        %v1799 = vmax.f32 %v1685, 0.0
        %v1800 = vmax.f32 %v1690, 0.0
        %v1801 = vmax.f32 %v1693, 0.0
        %v1802 = vmax.f32 %v1698, 0.0
        %v1803 = vmax.f32 %v1701, 0.0
        %v1804 = vmax.f32 %v1706, 0.0
        %v1805 = vmax.f32 %v1709, 0.0
        %v1806 = vmax.f32 %v1714, 0.0
        %v1807 = vmax.f32 %v1717, 0.0
        %v1808 = vmax.f32 %v1722, 0.0
        %v1809 = vmax.f32 %v1725, 0.0
        %v1810 = vmax.f32 %v1730, 0.0
        %v1811 = vmax.f32 %v1733, 0.0
        %v1812 = vmax.f32 %v1738, 0.0
        %v1813 = vmax.f32 %v1741, 0.0
        %v1814 = vmax.f32 %v1746, 0.0
        %v1815 = vmax.f32 %v1749, 0.0
        %v1816 = vpack.c.bf16 %v1753, %v1752
        %v1817 = vpack.c.bf16 %v1755, %v1754
        %v1818 = vpack.c.bf16 %v1757, %v1756
        %v1819 = vpack.c.bf16 %v1759, %v1758
        %v1820 = vpack.c.bf16 %v1761, %v1760
        %v1821 = vpack.c.bf16 %v1763, %v1762
        %v1822 = vpack.c.bf16 %v1765, %v1764
        %v1823 = vpack.c.bf16 %v1767, %v1766
        %v1824 = vpack.c.bf16 %v1769, %v1768
        %v1825 = vpack.c.bf16 %v1771, %v1770
        %v1826 = vpack.c.bf16 %v1773, %v1772
        %v1827 = vpack.c.bf16 %v1775, %v1774
        %v1828 = vpack.c.bf16 %v1777, %v1776
        %v1829 = vpack.c.bf16 %v1779, %v1778
        %v1830 = vpack.c.bf16 %v1781, %v1780
        %v1831 = vpack.c.bf16 %v1783, %v1782
        %v1832 = vpack.c.bf16 %v1785, %v1784
        %v1833 = vpack.c.bf16 %v1787, %v1786
        %v1834 = vpack.c.bf16 %v1789, %v1788
        %v1835 = vpack.c.bf16 %v1791, %v1790
        %v1836 = vpack.c.bf16 %v1793, %v1792
        %v1837 = vpack.c.bf16 %v1795, %v1794
        %v1838 = vpack.c.bf16 %v1797, %v1796
        %v1839 = vpack.c.bf16 %v1799, %v1798
        %v1840 = vpack.c.bf16 %v1801, %v1800
        %v1841 = vpack.c.bf16 %v1803, %v1802
        %v1842 = vpack.c.bf16 %v1805, %v1804
        %v1843 = vpack.c.bf16 %v1807, %v1806
        %v1844 = vpack.c.bf16 %v1809, %v1808
        %v1845 = vpack.c.bf16 %v1811, %v1810
        %v1846 = vpack.c.bf16 %v1813, %v1812
        %v1847 = vpack.c.bf16 %v1815, %v1814
        %v1848 = vld [vmem:[%s7] sm:$0xf]
        %v1849 = vld [vmem:[%s7 + $0x4] sm:$0xf]
        %v1850 = vld [vmem:[%s7 + $0x8] sm:$0xf]
        %v1851 = vld [vmem:[%s7 + $0xc] sm:$0xf]
        %v1852 = vld [vmem:[%s7 + $0x10] sm:$0xf]
        %v1853 = vld [vmem:[%s7 + $0x14] sm:$0xf]
        %v1854 = vld [vmem:[%s7 + $0x18] sm:$0xf]
        %v1855 = vld [vmem:[%s7 + $0x1c] sm:$0xf]
        %v1856 = vld [vmem:[%s7 + $0x20] sm:$0xf]
        %v1857 = vld [vmem:[%s7 + $0x24] sm:$0xf]
        %v1858 = vld [vmem:[%s7 + $0x28] sm:$0xf]
        %v1859 = vld [vmem:[%s7 + $0x2c] sm:$0xf]
        %v1860 = vld [vmem:[%s7 + $0x30] sm:$0xf]
        %v1861 = vld [vmem:[%s7 + $0x34] sm:$0xf]
        %v1862 = vld [vmem:[%s7 + $0x38] sm:$0xf]
        %v1863 = vld [vmem:[%s7 + $0x3c] sm:$0xf]
        %v1864 = vld [vmem:[%s8] sm:$0x1]
        %v1866 = vlaneseq
        %v1867 = vshrl.u32 %v1866, 7
        %v1868 = vsub.s32 0, %v1867
        %v1869 = vrot.slane %v1864, %v1868
        %v1887 = vunpack.c.l.b16 %v1848
        %v1888 = vunpack.c.l.b16 %v1849
        %v1889 = vunpack.c.l.b16 %v1850
        %v1890 = vunpack.c.l.b16 %v1851
        %v1891 = vunpack.c.l.b16 %v1852
        %v1892 = vunpack.c.l.b16 %v1853
        %v1893 = vunpack.c.l.b16 %v1854
        %v1894 = vunpack.c.l.b16 %v1855
        %v1895 = vunpack.c.l.b16 %v1856
        %v1896 = vunpack.c.l.b16 %v1857
        %v1897 = vunpack.c.l.b16 %v1858
        %v1898 = vunpack.c.l.b16 %v1859
        %v1899 = vunpack.c.l.b16 %v1860
        %v1900 = vunpack.c.l.b16 %v1861
        %v1901 = vunpack.c.l.b16 %v1862
        %v1902 = vunpack.c.l.b16 %v1863
        %v1903 = vpack.c.b16 %v1888, %v1887
        %v1904 = vpack.c.b16 %v1890, %v1889
        %v1905 = vpack.c.b16 %v1892, %v1891
        %v1906 = vpack.c.b16 %v1894, %v1893
        %v1907 = vpack.c.b16 %v1896, %v1895
        %v1908 = vpack.c.b16 %v1898, %v1897
        %v1909 = vpack.c.b16 %v1900, %v1899
        %v1910 = vpack.c.b16 %v1902, %v1901
        %1919 = vmatprep.subr.bf16.mxu0 0
        %1920 = vmatpush1.bf16.msra.mxu0 %v1903
        %1921 = vmatprep.subr.bf16.mxu0 0
        %1922 = vmatpush1.bf16.msra.mxu0 %v1904
        %1923 = vmatprep.subr.bf16.mxu0 0
        %1924 = vmatpush1.bf16.msra.mxu0 %v1905
        %1925 = vmatprep.subr.bf16.mxu0 0
        %1926 = vmatpush1.bf16.msra.mxu0 %v1906
        %1927 = vmatprep.subr.bf16.mxu0 0
        %1928 = vmatpush1.bf16.msra.mxu0 %v1907
        %1929 = vmatprep.subr.bf16.mxu0 0
        %1930 = vmatpush1.bf16.msra.mxu0 %v1908
        %1931 = vmatprep.subr.bf16.mxu0 0
        %1932 = vmatpush1.bf16.msra.mxu0 %v1909
        %1933 = vmatprep.subr.bf16.mxu0 0
        %1934 = vmatpush1.bf16.msra.mxu0 %v1910
        %1935 = vmatprep.subr.bf16.mxu0 0
        %1936 = vmatpush1.bf16.msra.mxu0 0
        %1937 = vmatprep.subr.bf16.mxu0 0
        %1938 = vmatpush1.bf16.msra.mxu0 0
        %1939 = vmatprep.subr.bf16.mxu0 0
        %1940 = vmatpush1.bf16.msra.mxu0 0
        %1941 = vmatprep.subr.bf16.mxu0 0
        %1942 = vmatpush1.bf16.msra.mxu0 0
        %1943 = vmatprep.subr.bf16.mxu0 0
        %1944 = vmatpush1.bf16.msra.mxu0 0
        %1945 = vmatprep.subr.bf16.mxu0 0
        %1946 = vmatpush1.bf16.msra.mxu0 0
        %1947 = vmatprep.subr.bf16.mxu0 0
        %1948 = vmatpush1.bf16.msra.mxu0 0
        %1949 = vmatprep.subr.bf16.mxu0 0
        %1950 = vmatpush1.bf16.msra.mxu0 0
        %1951 = vmatprep.mubr.bf16.mxu0 0
        %1952 = vmatmul.mubr.bf16.gmra.mrb[0].mxu0 %v1816
        %v1953 = vpop.f32.mrb[0].mxu0
        %v1954 = vadd.f32 %v1869, %v1953
        %v1955 = vpop.f32.mrb[0].mxu0
        %v1956 = vpop.f32.mrb[0].mxu0
        %v1957 = vadd.f32 %v1869, %v1956
        %v1958 = vpop.f32.mrb[0].mxu0
        %1959 = vmatprep.mubr.bf16.mxu0 0
        %1960 = vmatmul.mubr.bf16.gmra.mrb[0].mxu0 %v1817
        %v1961 = vpop.f32.mrb[0].mxu0
        %v1962 = vadd.f32 %v1869, %v1961
        %v1963 = vpop.f32.mrb[0].mxu0
        %v1964 = vpop.f32.mrb[0].mxu0
        %v1965 = vadd.f32 %v1869, %v1964
        %v1966 = vpop.f32.mrb[0].mxu0
        %1967 = vmatprep.mubr.bf16.mxu0 0
        %1968 = vmatmul.mubr.bf16.gmra.mrb[0].mxu0 %v1818
        %v1969 = vpop.f32.mrb[0].mxu0
        %v1970 = vadd.f32 %v1869, %v1969
        %v1971 = vpop.f32.mrb[0].mxu0
        %v1972 = vpop.f32.mrb[0].mxu0
        %v1973 = vadd.f32 %v1869, %v1972
        %v1974 = vpop.f32.mrb[0].mxu0
        %1975 = vmatprep.mubr.bf16.mxu0 0
        %1976 = vmatmul.mubr.bf16.gmra.mrb[0].mxu0 %v1819
        %v1977 = vpop.f32.mrb[0].mxu0
        %v1978 = vadd.f32 %v1869, %v1977
        %v1979 = vpop.f32.mrb[0].mxu0
        %v1980 = vpop.f32.mrb[0].mxu0
        %v1981 = vadd.f32 %v1869, %v1980
        %v1982 = vpop.f32.mrb[0].mxu0
        %1983 = vmatprep.mubr.bf16.mxu0 0
        %1984 = vmatmul.mubr.bf16.gmra.mrb[0].mxu0 %v1820
        %v1985 = vpop.f32.mrb[0].mxu0
        %v1986 = vadd.f32 %v1869, %v1985
        %v1987 = vpop.f32.mrb[0].mxu0
        %v1988 = vpop.f32.mrb[0].mxu0
        %v1989 = vadd.f32 %v1869, %v1988
        %v1990 = vpop.f32.mrb[0].mxu0
        %1991 = vmatprep.mubr.bf16.mxu0 0
        %1992 = vmatmul.mubr.bf16.gmra.mrb[0].mxu0 %v1821
        %v1993 = vpop.f32.mrb[0].mxu0
        %v1994 = vadd.f32 %v1869, %v1993
        %v1995 = vpop.f32.mrb[0].mxu0
        %v1996 = vpop.f32.mrb[0].mxu0
        %v1997 = vadd.f32 %v1869, %v1996
        %v1998 = vpop.f32.mrb[0].mxu0
        %1999 = vmatprep.mubr.bf16.mxu0 0
        %2000 = vmatmul.mubr.bf16.gmra.mrb[0].mxu0 %v1822
        %v2001 = vpop.f32.mrb[0].mxu0
        %v2002 = vadd.f32 %v1869, %v2001
        %v2003 = vpop.f32.mrb[0].mxu0
        %v2004 = vpop.f32.mrb[0].mxu0
        %v2005 = vadd.f32 %v1869, %v2004
        %v2006 = vpop.f32.mrb[0].mxu0
        %2007 = vmatprep.mubr.bf16.mxu0 0
        %2008 = vmatmul.mubr.bf16.gmra.mrb[0].mxu0 %v1823
        %v2009 = vpop.f32.mrb[0].mxu0
        %v2010 = vadd.f32 %v1869, %v2009
        %v2011 = vpop.f32.mrb[0].mxu0
        %v2012 = vpop.f32.mrb[0].mxu0
        %v2013 = vadd.f32 %v1869, %v2012
        %v2014 = vpop.f32.mrb[0].mxu0
        %2015 = vmatprep.mubr.bf16.mxu0 0
        %2016 = vmatmul.mubr.bf16.gmra.mrb[0].mxu0 %v1824
        %v2017 = vpop.f32.mrb[0].mxu0
        %v2018 = vadd.f32 %v1869, %v2017
        %v2019 = vpop.f32.mrb[0].mxu0
        %v2020 = vpop.f32.mrb[0].mxu0
        %v2021 = vadd.f32 %v1869, %v2020
        %v2022 = vpop.f32.mrb[0].mxu0
        %2023 = vmatprep.mubr.bf16.mxu0 0
        %2024 = vmatmul.mubr.bf16.gmra.mrb[0].mxu0 %v1825
        %v2025 = vpop.f32.mrb[0].mxu0
        %v2026 = vadd.f32 %v1869, %v2025
        %v2027 = vpop.f32.mrb[0].mxu0
        %v2028 = vpop.f32.mrb[0].mxu0
        %v2029 = vadd.f32 %v1869, %v2028
        %v2030 = vpop.f32.mrb[0].mxu0
        %2031 = vmatprep.mubr.bf16.mxu0 0
        %2032 = vmatmul.mubr.bf16.gmra.mrb[0].mxu0 %v1826
        %v2033 = vpop.f32.mrb[0].mxu0
        %v2034 = vadd.f32 %v1869, %v2033
        %v2035 = vpop.f32.mrb[0].mxu0
        %v2036 = vpop.f32.mrb[0].mxu0
        %v2037 = vadd.f32 %v1869, %v2036
        %v2038 = vpop.f32.mrb[0].mxu0
        %2039 = vmatprep.mubr.bf16.mxu0 0
        %2040 = vmatmul.mubr.bf16.gmra.mrb[0].mxu0 %v1827
        %v2041 = vpop.f32.mrb[0].mxu0
        %v2042 = vadd.f32 %v1869, %v2041
        %v2043 = vpop.f32.mrb[0].mxu0
        %v2044 = vpop.f32.mrb[0].mxu0
        %v2045 = vadd.f32 %v1869, %v2044
        %v2046 = vpop.f32.mrb[0].mxu0
        %2047 = vmatprep.mubr.bf16.mxu0 0
        %2048 = vmatmul.mubr.bf16.gmra.mrb[0].mxu0 %v1828
        %v2049 = vpop.f32.mrb[0].mxu0
        %v2050 = vadd.f32 %v1869, %v2049
        %v2051 = vpop.f32.mrb[0].mxu0
        %v2052 = vpop.f32.mrb[0].mxu0
        %v2053 = vadd.f32 %v1869, %v2052
        %v2054 = vpop.f32.mrb[0].mxu0
        %2055 = vmatprep.mubr.bf16.mxu0 0
        %2056 = vmatmul.mubr.bf16.gmra.mrb[0].mxu0 %v1829
        %v2057 = vpop.f32.mrb[0].mxu0
        %v2058 = vadd.f32 %v1869, %v2057
        %v2059 = vpop.f32.mrb[0].mxu0
        %v2060 = vpop.f32.mrb[0].mxu0
        %v2061 = vadd.f32 %v1869, %v2060
        %v2062 = vpop.f32.mrb[0].mxu0
        %2063 = vmatprep.mubr.bf16.mxu0 0
        %2064 = vmatmul.mubr.bf16.gmra.mrb[0].mxu0 %v1830
        %v2065 = vpop.f32.mrb[0].mxu0
        %v2066 = vadd.f32 %v1869, %v2065
        %v2067 = vpop.f32.mrb[0].mxu0
        %v2068 = vpop.f32.mrb[0].mxu0
        %v2069 = vadd.f32 %v1869, %v2068
        %v2070 = vpop.f32.mrb[0].mxu0
        %2071 = vmatprep.mubr.bf16.mxu0 0
        %2072 = vmatmul.mubr.bf16.gmra.mrb[0].mxu0 %v1831
        %v2073 = vpop.f32.mrb[0].mxu0
        %v2074 = vadd.f32 %v1869, %v2073
        %v2075 = vpop.f32.mrb[0].mxu0
        %v2076 = vpop.f32.mrb[0].mxu0
        %v2077 = vadd.f32 %v1869, %v2076
        %v2078 = vpop.f32.mrb[0].mxu0
        %2079 = vmatprep.mubr.bf16.mxu0 0
        %2080 = vmatmul.mubr.bf16.gmra.mrb[0].mxu0 %v1832
        %v2081 = vpop.f32.mrb[0].mxu0
        %v2082 = vadd.f32 %v1869, %v2081
        %v2083 = vpop.f32.mrb[0].mxu0
        %v2084 = vpop.f32.mrb[0].mxu0
        %v2085 = vadd.f32 %v1869, %v2084
        %v2086 = vpop.f32.mrb[0].mxu0
        %2087 = vmatprep.mubr.bf16.mxu0 0
        %2088 = vmatmul.mubr.bf16.gmra.mrb[0].mxu0 %v1833
        %v2089 = vpop.f32.mrb[0].mxu0
        %v2090 = vadd.f32 %v1869, %v2089
        %v2091 = vpop.f32.mrb[0].mxu0
        %v2092 = vpop.f32.mrb[0].mxu0
        %v2093 = vadd.f32 %v1869, %v2092
        %v2094 = vpop.f32.mrb[0].mxu0
        %2095 = vmatprep.mubr.bf16.mxu0 0
        %2096 = vmatmul.mubr.bf16.gmra.mrb[0].mxu0 %v1834
        %v2097 = vpop.f32.mrb[0].mxu0
        %v2098 = vadd.f32 %v1869, %v2097
        %v2099 = vpop.f32.mrb[0].mxu0
        %v2100 = vpop.f32.mrb[0].mxu0
        %v2101 = vadd.f32 %v1869, %v2100
        %v2102 = vpop.f32.mrb[0].mxu0
        %2103 = vmatprep.mubr.bf16.mxu0 0
        %2104 = vmatmul.mubr.bf16.gmra.mrb[0].mxu0 %v1835
        %v2105 = vpop.f32.mrb[0].mxu0
        %v2106 = vadd.f32 %v1869, %v2105
        %v2107 = vpop.f32.mrb[0].mxu0
        %v2108 = vpop.f32.mrb[0].mxu0
        %v2109 = vadd.f32 %v1869, %v2108
        %v2110 = vpop.f32.mrb[0].mxu0
        %2111 = vmatprep.mubr.bf16.mxu0 0
        %2112 = vmatmul.mubr.bf16.gmra.mrb[0].mxu0 %v1836
        %v2113 = vpop.f32.mrb[0].mxu0
        %v2114 = vadd.f32 %v1869, %v2113
        %v2115 = vpop.f32.mrb[0].mxu0
        %v2116 = vpop.f32.mrb[0].mxu0
        %v2117 = vadd.f32 %v1869, %v2116
        %v2118 = vpop.f32.mrb[0].mxu0
        %2119 = vmatprep.mubr.bf16.mxu0 0
        %2120 = vmatmul.mubr.bf16.gmra.mrb[0].mxu0 %v1837
        %v2121 = vpop.f32.mrb[0].mxu0
        %v2122 = vadd.f32 %v1869, %v2121
        %v2123 = vpop.f32.mrb[0].mxu0
        %v2124 = vpop.f32.mrb[0].mxu0
        %v2125 = vadd.f32 %v1869, %v2124
        %v2126 = vpop.f32.mrb[0].mxu0
        %2127 = vmatprep.mubr.bf16.mxu0 0
        %2128 = vmatmul.mubr.bf16.gmra.mrb[0].mxu0 %v1838
        %v2129 = vpop.f32.mrb[0].mxu0
        %v2130 = vadd.f32 %v1869, %v2129
        %v2131 = vpop.f32.mrb[0].mxu0
        %v2132 = vpop.f32.mrb[0].mxu0
        %v2133 = vadd.f32 %v1869, %v2132
        %v2134 = vpop.f32.mrb[0].mxu0
        %2135 = vmatprep.mubr.bf16.mxu0 0
        %2136 = vmatmul.mubr.bf16.gmra.mrb[0].mxu0 %v1839
        %v2137 = vpop.f32.mrb[0].mxu0
        %v2138 = vadd.f32 %v1869, %v2137
        %v2139 = vpop.f32.mrb[0].mxu0
        %v2140 = vpop.f32.mrb[0].mxu0
        %v2141 = vadd.f32 %v1869, %v2140
        %v2142 = vpop.f32.mrb[0].mxu0
        %2143 = vmatprep.mubr.bf16.mxu0 0
        %2144 = vmatmul.mubr.bf16.gmra.mrb[0].mxu0 %v1840
        %v2145 = vpop.f32.mrb[0].mxu0
        %v2146 = vadd.f32 %v1869, %v2145
        %v2147 = vpop.f32.mrb[0].mxu0
        %v2148 = vpop.f32.mrb[0].mxu0
        %v2149 = vadd.f32 %v1869, %v2148
        %v2150 = vpop.f32.mrb[0].mxu0
        %2151 = vmatprep.mubr.bf16.mxu0 0
        %2152 = vmatmul.mubr.bf16.gmra.mrb[0].mxu0 %v1841
        %v2153 = vpop.f32.mrb[0].mxu0
        %v2154 = vadd.f32 %v1869, %v2153
        %v2155 = vpop.f32.mrb[0].mxu0
        %v2156 = vpop.f32.mrb[0].mxu0
        %v2157 = vadd.f32 %v1869, %v2156
        %v2158 = vpop.f32.mrb[0].mxu0
        %2159 = vmatprep.mubr.bf16.mxu0 0
        %2160 = vmatmul.mubr.bf16.gmra.mrb[0].mxu0 %v1842
        %v2161 = vpop.f32.mrb[0].mxu0
        %v2162 = vadd.f32 %v1869, %v2161
        %v2163 = vpop.f32.mrb[0].mxu0
        %v2164 = vpop.f32.mrb[0].mxu0
        %v2165 = vadd.f32 %v1869, %v2164
        %v2166 = vpop.f32.mrb[0].mxu0
        %2167 = vmatprep.mubr.bf16.mxu0 0
        %2168 = vmatmul.mubr.bf16.gmra.mrb[0].mxu0 %v1843
        %v2169 = vpop.f32.mrb[0].mxu0
        %v2170 = vadd.f32 %v1869, %v2169
        %v2171 = vpop.f32.mrb[0].mxu0
        %v2172 = vpop.f32.mrb[0].mxu0
        %v2173 = vadd.f32 %v1869, %v2172
        %v2174 = vpop.f32.mrb[0].mxu0
        %2175 = vmatprep.mubr.bf16.mxu0 0
        %2176 = vmatmul.mubr.bf16.gmra.mrb[0].mxu0 %v1844
        %v2177 = vpop.f32.mrb[0].mxu0
        %v2178 = vadd.f32 %v1869, %v2177
        %v2179 = vpop.f32.mrb[0].mxu0
        %v2180 = vpop.f32.mrb[0].mxu0
        %v2181 = vadd.f32 %v1869, %v2180
        %v2182 = vpop.f32.mrb[0].mxu0
        %2183 = vmatprep.mubr.bf16.mxu0 0
        %2184 = vmatmul.mubr.bf16.gmra.mrb[0].mxu0 %v1845
        %v2185 = vpop.f32.mrb[0].mxu0
        %v2186 = vadd.f32 %v1869, %v2185
        %v2187 = vpop.f32.mrb[0].mxu0
        %v2188 = vpop.f32.mrb[0].mxu0
        %v2189 = vadd.f32 %v1869, %v2188
        %v2190 = vpop.f32.mrb[0].mxu0
        %2191 = vmatprep.mubr.bf16.mxu0 0
        %2192 = vmatmul.mubr.bf16.gmra.mrb[0].mxu0 %v1846
        %v2193 = vpop.f32.mrb[0].mxu0
        %v2194 = vadd.f32 %v1869, %v2193
        %v2195 = vpop.f32.mrb[0].mxu0
        %v2196 = vpop.f32.mrb[0].mxu0
        %v2197 = vadd.f32 %v1869, %v2196
        %v2198 = vpop.f32.mrb[0].mxu0
        %2199 = vmatprep.mubr.bf16.mxu0 0
        %2200 = vmatmul.mubr.bf16.gmra.mrb[0].mxu0 %v1847
        %v2201 = vpop.f32.mrb[0].mxu0
        %v2202 = vadd.f32 %v1869, %v2201
        %v2203 = vpop.f32.mrb[0].mxu0
        %v2204 = vpop.f32.mrb[0].mxu0
        %v2205 = vadd.f32 %v1869, %v2204
        %v2206 = vpop.f32.mrb[0].mxu0
        %2207 = vdwg.mxu0
        %2208 = vst [vmem:[%s326] sm:$0xff] %v1954
        %2209 = vst [vmem:[%s326 + $0x8] sm:$0xff] %v1957
        %2210 = vst [vmem:[%s326 + $0x10] sm:$0xff] %v1962
        %2211 = vst [vmem:[%s326 + $0x18] sm:$0xff] %v1965
        %2212 = vst [vmem:[%s326 + $0x20] sm:$0xff] %v1970
        %2213 = vst [vmem:[%s326 + $0x28] sm:$0xff] %v1973
        %2214 = vst [vmem:[%s326 + $0x30] sm:$0xff] %v1978
        %2215 = vst [vmem:[%s326 + $0x38] sm:$0xff] %v1981
        %2216 = vst [vmem:[%s326 + $0x40] sm:$0xff] %v1986
        %2217 = vst [vmem:[%s326 + $0x48] sm:$0xff] %v1989
        %2218 = vst [vmem:[%s326 + $0x50] sm:$0xff] %v1994
        %2219 = vst [vmem:[%s326 + $0x58] sm:$0xff] %v1997
        %2220 = vst [vmem:[%s326 + $0x60] sm:$0xff] %v2002
        %2221 = vst [vmem:[%s326 + $0x68] sm:$0xff] %v2005
        %2222 = vst [vmem:[%s326 + $0x70] sm:$0xff] %v2010
        %2223 = vst [vmem:[%s326 + $0x78] sm:$0xff] %v2013
        %2224 = vst [vmem:[%s326 + $0x80] sm:$0xff] %v2018
        %2225 = vst [vmem:[%s326 + $0x88] sm:$0xff] %v2021
        %2226 = vst [vmem:[%s326 + $0x90] sm:$0xff] %v2026
        %2227 = vst [vmem:[%s326 + $0x98] sm:$0xff] %v2029
        %2228 = vst [vmem:[%s326 + $0xa0] sm:$0xff] %v2034
        %2229 = vst [vmem:[%s326 + $0xa8] sm:$0xff] %v2037
        %2230 = vst [vmem:[%s326 + $0xb0] sm:$0xff] %v2042
        %2231 = vst [vmem:[%s326 + $0xb8] sm:$0xff] %v2045
        %2232 = vst [vmem:[%s326 + $0xc0] sm:$0xff] %v2050
        %2233 = vst [vmem:[%s326 + $0xc8] sm:$0xff] %v2053
        %2234 = vst [vmem:[%s326 + $0xd0] sm:$0xff] %v2058
        %2235 = vst [vmem:[%s326 + $0xd8] sm:$0xff] %v2061
        %2236 = vst [vmem:[%s326 + $0xe0] sm:$0xff] %v2066
        %2237 = vst [vmem:[%s326 + $0xe8] sm:$0xff] %v2069
        %2238 = vst [vmem:[%s326 + $0xf0] sm:$0xff] %v2074
        %2239 = vst [vmem:[%s326 + $0xf8] sm:$0xff] %v2077
        %2240 = vst [vmem:[%s326 + $0x100] sm:$0xff] %v2082
        %2241 = vst [vmem:[%s326 + $0x108] sm:$0xff] %v2085
        %2242 = vst [vmem:[%s326 + $0x110] sm:$0xff] %v2090
        %2243 = vst [vmem:[%s326 + $0x118] sm:$0xff] %v2093
        %2244 = vst [vmem:[%s326 + $0x120] sm:$0xff] %v2098
        %2245 = vst [vmem:[%s326 + $0x128] sm:$0xff] %v2101
        %2246 = vst [vmem:[%s326 + $0x130] sm:$0xff] %v2106
        %2247 = vst [vmem:[%s326 + $0x138] sm:$0xff] %v2109
        %2248 = vst [vmem:[%s326 + $0x140] sm:$0xff] %v2114
        %2249 = vst [vmem:[%s326 + $0x148] sm:$0xff] %v2117
        %2250 = vst [vmem:[%s326 + $0x150] sm:$0xff] %v2122
        %2251 = vst [vmem:[%s326 + $0x158] sm:$0xff] %v2125
        %2252 = vst [vmem:[%s326 + $0x160] sm:$0xff] %v2130
        %2253 = vst [vmem:[%s326 + $0x168] sm:$0xff] %v2133
        %2254 = vst [vmem:[%s326 + $0x170] sm:$0xff] %v2138
        %2255 = vst [vmem:[%s326 + $0x178] sm:$0xff] %v2141
        %2256 = vst [vmem:[%s326 + $0x180] sm:$0xff] %v2146
        %2257 = vst [vmem:[%s326 + $0x188] sm:$0xff] %v2149
        %2258 = vst [vmem:[%s326 + $0x190] sm:$0xff] %v2154
        %2259 = vst [vmem:[%s326 + $0x198] sm:$0xff] %v2157
        %2260 = vst [vmem:[%s326 + $0x1a0] sm:$0xff] %v2162
        %2261 = vst [vmem:[%s326 + $0x1a8] sm:$0xff] %v2165
        %2262 = vst [vmem:[%s326 + $0x1b0] sm:$0xff] %v2170
        %2263 = vst [vmem:[%s326 + $0x1b8] sm:$0xff] %v2173
        %2264 = vst [vmem:[%s326 + $0x1c0] sm:$0xff] %v2178
        %2265 = vst [vmem:[%s326 + $0x1c8] sm:$0xff] %v2181
        %2266 = vst [vmem:[%s326 + $0x1d0] sm:$0xff] %v2186
        %2267 = vst [vmem:[%s326 + $0x1d8] sm:$0xff] %v2189
        %2268 = vst [vmem:[%s326 + $0x1e0] sm:$0xff] %v2194
        %2269 = vst [vmem:[%s326 + $0x1e8] sm:$0xff] %v2197
        %2270 = vst [vmem:[%s326 + $0x1f0] sm:$0xff] %v2202
        %2271 = vst [vmem:[%s326 + $0x1f8] sm:$0xff] %v2205
        %s2272 = sand.u32 %s225, 1
        %s2273 = scalar_lea.sflag [#allocation3], %s2272
        %s2274 = sand.u32 %s225, 1
        %s2275 = smul.addr %s2274, 512
        %s2276 = scalar_lea.vmem [#allocation2], %s2275
        // Predicated region
        $region57: #{tpu_custom_call.1} parent=55 // pred_check
          %p2277 = pneg %p235
        $region58: #{tpu_custom_call.1} parent=55 // pred_check_branch
          %2279 = sbr.rel (%p2277) target = $region60
        $region59: #{tpu_custom_call.1} parent=55 // pred_region
          %s2280 = smul.u32 64, %s23
          %s2282 = ssub.s32 8192, 8192
          %2283 = vsyncadd %s2273, %s2282
          %s2284 = smul.addr %s2280, 128
          %s2285 = scalar_lea.hbm %s9, %s2284
          %s2286 = sshll.u32 %s2276, 4
          %s2287 = int_to_ptr.vmem [resolvable:$true] %s2286
          %2292 = dma.vmem_to_hbm [thread:$0]  %s2287, 8192, %s2285, %s2273, 128, 128, 8
        $region60: #{tpu_custom_call.1} parent=55 // pred_fallthru
          _
      $region56: #{tpu_custom_call.1} parent=5 // pred_fallthru
        _
      %p2293 = scmp.le.s32.totalorder 2, %s18
      // Predicated region
      $region61: #{tpu_custom_call.1} parent=5 // pred_check
        %p2294 = pneg %p2293
      $region62: #{tpu_custom_call.1} parent=5 // pred_check_branch
        %2296 = sbr.rel (%p2294) target = $region64
      $region63: #{tpu_custom_call.1} parent=5 // pred_region
        %s2297 = ssub.s32 %s18, 2
        // Predicated region
        $region65: #{tpu_custom_call.1} parent=63 // pred_check
          %p2298 = pneg %p241
        $region66: #{tpu_custom_call.1} parent=63 // pred_check_branch
          %2300 = sbr.rel (%p2298) target = $region68
        $region67: #{tpu_custom_call.1} parent=63 // pred_region
          %s2301 = sand.u32 %s226, 1
          %s2302 = scalar_lea.sflag [#allocation3], %s2301
          %s2303 = sand.u32 %s226, 1
          %s2304 = smul.addr %s2303, 512
          %s2305 = scalar_lea.vmem [#allocation2], %s2304
          %2306 = dma.done %s2302, 8192
        $region68: #{tpu_custom_call.1} parent=63 // pred_fallthru
          _
      $region64: #{tpu_custom_call.1} parent=5 // pred_fallthru
        _
    $region6: #{tpu_custom_call.1} parent=1 // loop_footer
      %s22 = sadd.s32 1, %s18
    $region7: #{tpu_custom_call.1} parent=1 // loop_footer_branch
      %17 = sbr.rel target = $region3
    $region8: #{tpu_custom_call.1} parent=1 // loop_exit
      _
    %2307 = vsyncpa [#allocation3], 1
    %s2308 = scalar_lea.sflag [#allocation3], 1
    %2309 = vsyncpa %s2308, 1

</llo_original>
